<compile_context>
chip_gen: v5e
topology: v5e:2x2
jax: 0.10.0
libtpu: 0.0.40
codegen_flags: <defaults>
</compile_context>

<pallas_src>
import functools

import jax
import jax.numpy as jnp
from jax import lax
from jax.experimental import pallas as pl
from jax.experimental.pallas import tpu as pltpu

ITER_ = 3
ALPHA = 0.5
SMOOTH = 1e-08

_LANE = 128
# f32 elements per input tile (~512 KiB): keeps peak VMEM (2 inputs
# double-buffered + ~8 live skeleton intermediates + masks) well under the
# 16/32 MiB scoped limits on v5e/v6e/v7x and avoids spilling.
_TILE_ELEM_BUDGET = 128 * 1024


# ------------------- in-kernel morphology (hoisted masks) -------------------
def _make_masks(shape, w_block):
    """Validity masks for the 4 one-step shifts, computed once per kernel call.

    shape = (B, H, L) with L = k * w_block (k images packed along lanes).
    A rolled value is valid only if its source lies inside the same image.
    """
    h = lax.broadcasted_iota(jnp.int32, shape, len(shape) - 2)
    w = lax.broadcasted_iota(jnp.int32, shape, len(shape) - 1) % w_block
    H = shape[-2]
    return (
        h >= 1,             # roll(+1, H): source row h-1
        h <= H - 2,         # roll(-1, H): source row h+1
        w >= 1,             # roll(+1, W): source col w-1 (same image)
        w <= w_block - 2,   # roll(-1, W): source col w+1 (same image)
    )


def _soft_erode(x, masks):
    # -maxpool(-x,(3,1),pad(1,0)) min -maxpool(-x,(1,3),pad(0,1))
    #  == min over the 5-point cross with +inf implicit padding.
    # Reassociated: 4 mins instead of 5 (VALU is the binding slot).
    hp, hm, wp, wm = masks
    inf = jnp.float32(jnp.inf)
    up = jnp.where(hp, jnp.roll(x, 1, axis=-2), inf)
    dn = jnp.where(hm, jnp.roll(x, -1, axis=-2), inf)
    lf = jnp.where(wp, jnp.roll(x, 1, axis=-1), inf)
    rt = jnp.where(wm, jnp.roll(x, -1, axis=-1), inf)
    return jnp.minimum(jnp.minimum(jnp.minimum(up, dn), jnp.minimum(lf, rt)), x)


def _soft_dilate(x, masks):
    # maxpool(x,(3,3),pad(1,1)) with -inf padding, separable: H then W.
    hp, hm, wp, wm = masks
    ninf = jnp.float32(-jnp.inf)
    up = jnp.where(hp, jnp.roll(x, 1, axis=-2), ninf)
    dn = jnp.where(hm, jnp.roll(x, -1, axis=-2), ninf)
    m1 = jnp.maximum(jnp.maximum(up, dn), x)
    lf = jnp.where(wp, jnp.roll(m1, 1, axis=-1), ninf)
    rt = jnp.where(wm, jnp.roll(m1, -1, axis=-1), ninf)
    return jnp.maximum(jnp.maximum(lf, rt), m1)


def _soft_open(x, masks):
    return _soft_dilate(_soft_erode(x, masks), masks)


def _soft_skel(img, masks, iter_):
    img1 = _soft_open(img, masks)
    skel = jax.nn.relu(img - img1)
    for _ in range(iter_):  # small static count -> unrolled in the kernel
        img = _soft_erode(img, masks)
        img1 = _soft_open(img, masks)
        delta = jax.nn.relu(img - img1)
        skel = skel + jax.nn.relu(delta - skel * delta)
    return skel


# ------------------------------ Pallas kernel ------------------------------
def cldice_kernel(yt_ref, yp_ref, out_ref, *, w_block, iter_):
    # Cast after the VMEM load (keeps f32 compute on all gens; halves DMA if
    # callers ever feed bf16).
    yt = yt_ref[...].astype(jnp.float32)
    yp = yp_ref[...].astype(jnp.float32)

    masks = _make_masks(yt.shape, w_block)   # hoisted: computed once, reused ~88x

    skel_p = _soft_skel(yp, masks, iter_)
    skel_t = _soft_skel(yt, masks, iter_)

    L = yt.shape[-1]

    def psum(x):  # sum over batch + sublane axes, keep lanes -> (1, L)
        return jnp.sum(jnp.sum(x, axis=0), axis=0, keepdims=True)

    rows = jnp.concatenate(
        [
            psum(yt * yp),        # 0: intersection
            psum(yt),             # 1: sum(y_true)
            psum(yp),             # 2: sum(y_pred)
            psum(skel_p * yt),    # 3: sum(skel_pred * y_true)
            psum(skel_p),         # 4: sum(skel_pred)
            psum(skel_t * yp),    # 5: sum(skel_true * y_pred)
            psum(skel_t),         # 6: sum(skel_true)
            jnp.zeros((1, L), jnp.float32),
        ],
        axis=0,
    )                              # (8, L)
    out_ref[...] = rows[None]


# ------------------------------ host wrapper -------------------------------
def _choose_pack_k(nc, w):
    """Images packed along lanes so the lane axis is a multiple of 128 if possible."""
    if nc <= 1 or w % _LANE == 0:
        return 1
    for k in range(1, nc + 1):              # smallest k giving full lane alignment
        if nc % k == 0 and (k * w) % _LANE == 0:
            return k
    best = 1
    for k in range(1, nc + 1):              # else pack as much as fits ~512 lanes
        if nc % k == 0 and k * w <= 4 * _LANE:
            best = k
    return best


def _choose_batch_block(G, per_group_elems):
    cap = max(1, _TILE_ELEM_BUDGET // per_group_elems)
    best = 1
    for b in range(1, min(G, cap) + 1):     # largest divisor of G within budget
        if G % b == 0:
            best = b
    return best


@jax.jit
def soft_dice_cldice(y_true, y_pred):
    """y_true, y_pred: float arrays of shape (N, C, H, W). Returns scalar loss."""
    N, C, H, W = y_true.shape
    NC = N * C
    k = _choose_pack_k(NC, W)
    G = NC // k
    L = k * W

    def pack(x):
        # (N,C,H,W) -> (G, H, k*W): k images side by side along lanes.
        x = x.reshape(G, k, H, W).transpose(0, 2, 1, 3)
        return x.reshape(G, H, L)

    yt = pack(y_true)
    yp = pack(y_pred)

    Bg = _choose_batch_block(G, H * L)
    T = G // Bg

    kern = functools.partial(cldice_kernel, w_block=W, iter_=ITER_)
    partials = pl.pallas_call(
        kern,
        out_shape=jax.ShapeDtypeStruct((T, 8, L), jnp.float32),
        grid_spec=pltpu.PrefetchScalarGridSpec(
            num_scalar_prefetch=0,
            grid=(T,),
            in_specs=[
                pl.BlockSpec((Bg, H, L), lambda i: (i, 0, 0)),
                pl.BlockSpec((Bg, H, L), lambda i: (i, 0, 0)),
            ],
            out_specs=pl.BlockSpec((1, 8, L), lambda i: (i, 0, 0)),
        ),
        compiler_params=pltpu.CompilerParams(
            # No carried state: each tile writes its own partial-sum block, so
            # the batch axis can shard across v7x's two TensorCores.
            dimension_semantics=("parallel",),
            vmem_limit_bytes=32 * 1024 * 1024,
        ),
    )(yt, yp)

    p = jnp.sum(partials, axis=(0, 2))      # (8,) global f32 sums
    inter, sum_t, sum_p, sp_yt, sum_sp, st_yp, sum_st = (p[i] for i in range(7))

    dice = 1.0 - (2.0 * inter + SMOOTH) / (sum_t + sum_p + SMOOTH)
    tprec = (sp_yt + SMOOTH) / (sum_sp + SMOOTH)
    tsens = (st_yp + SMOOTH) / (sum_st + SMOOTH)
    cl_dice = 1.0 - 2.0 * (tprec * tsens) / (tprec + tsens)
    return (1.0 - ALPHA) * dice + ALPHA * cl_dice


# --------------------- independent pure-JAX reference ----------------------
def _ref_pool_max3(x, kh, kw):
    NCn, H, W = x.shape
    ph, pw = kh // 2, kw // 2
    xp = jnp.pad(x, ((0, 0), (ph, ph), (pw, pw)), constant_values=-jnp.inf)
    out = jnp.full_like(x, -jnp.inf)
    for dh in range(kh):
        for dw in range(kw):
            out = jnp.maximum(out, xp[:, dh:dh + H, dw:dw + W])
    return out


def _ref_erode(x):
    p1 = -_ref_pool_max3(-x, 3, 1)
    p2 = -_ref_pool_max3(-x, 1, 3)
    return jnp.minimum(p1, p2)


def _ref_dilate(x):
    return _ref_pool_max3(x, 3, 3)


def _ref_open(x):
    return _ref_dilate(_ref_erode(x))


def _ref_skel(img, iter_):
    img1 = _ref_open(img)
    skel = jax.nn.relu(img - img1)
    for _ in range(iter_):
        img = _ref_erode(img)
        img1 = _ref_open(img)
        delta = jax.nn.relu(img - img1)
        skel = skel + jax.nn.relu(delta - skel * delta)
    return skel


def _ref_loss(y_true4, y_pred4, iter_=ITER_, alpha=ALPHA, smooth=SMOOTH):
    N, C, H, W = y_true4.shape
    yt = y_true4.reshape(N * C, H, W).astype(jnp.float32)
    yp = y_pred4.reshape(N * C, H, W).astype(jnp.float32)
    inter = jnp.sum(yt * yp)
    dice = 1.0 - (2.0 * inter + smooth) / (jnp.sum(yt) + jnp.sum(yp) + smooth)
    skel_p = _ref_skel(yp, iter_)
    skel_t = _ref_skel(yt, iter_)
    tprec = (jnp.sum(skel_p * yt) + smooth) / (jnp.sum(skel_p) + smooth)
    tsens = (jnp.sum(skel_t * yp) + smooth) / (jnp.sum(skel_t) + smooth)
    cl = 1.0 - 2.0 * (tprec * tsens) / (tprec + tsens)
    return (1.0 - alpha) * dice + alpha * cl


if __name__ == "__main__":
    key = jax.random.PRNGKey(0)
    k1, k2 = jax.random.split(key)
    # small shapes consistent with a 2D segmentation loss: NCHW
    y_true = jax.random.uniform(k1, (2, 4, 16, 16), dtype=jnp.float32)
    y_pred = jax.random.uniform(k2, (2, 4, 16, 16), dtype=jnp.float32)

    loss = soft_dice_cldice(y_true, y_pred)
    loss = jax.block_until_ready(loss)

    ref = _ref_loss(y_true, y_pred)
    assert jnp.allclose(loss, ref, atol=1e-5, rtol=1e-5), (loss, ref)

    print("KERNEL_OK")
</pallas_src>

<mosaic_0001>
module attributes {stable_mosaic.version = 11 : i64} {
  func.func @cldice_kernel(%arg0: i32, %arg1: memref<1x16x128xf32, #tpu.memory_space<vmem>>, %arg2: memref<1x16x128xf32, #tpu.memory_space<vmem>>, %arg3: memref<1x8x128xf32, #tpu.memory_space<vmem>>) attributes {dimension_semantics = [#tpu.dimension_semantics<parallel>], iteration_bounds = array<i64: 1>, scalar_prefetch = 0 : i64, scratch_operands = 0 : i64, tpu.core_type = #tpu.core_type<tc>, window_params = [{transform_indices = @transform_0, window_bounds = array<i64: 1, 16, 128>}, {transform_indices = @transform_1, window_bounds = array<i64: 1, 16, 128>}, {transform_indices = @transform_2, window_bounds = array<i64: 1, 8, 128>}]} {
    %c0 = arith.constant 0 : index
    %c0_0 = arith.constant 0 : index
    %c0_1 = arith.constant 0 : index
    %0 = vector.load %arg1[%c0, %c0_0, %c0_1] : memref<1x16x128xf32, #tpu.memory_space<vmem>>, vector<1x16x128xf32>
    %c0_2 = arith.constant 0 : index
    %c0_3 = arith.constant 0 : index
    %c0_4 = arith.constant 0 : index
    %1 = vector.load %arg2[%c0_2, %c0_3, %c0_4] : memref<1x16x128xf32, #tpu.memory_space<vmem>>, vector<1x16x128xf32>
    %2 = tpu.iota {dimensions = array<i32: 1>} : vector<1x16x128xi32>
    %3 = tpu.iota {dimensions = array<i32: 2>} : vector<1x16x128xi32>
    %c16_i32 = arith.constant 16 : i32
    %c0_i32 = arith.constant 0 : i32
    %4 = arith.cmpi eq, %c16_i32, %c0_i32 : i32
    %c1_i32 = arith.constant 1 : i32
    %5 = arith.select %4, %c1_i32, %c16_i32 : i32
    %6 = vector.broadcast %5 : i32 to vector<1x16x128xi32>
    %7 = arith.remsi %3, %6 : vector<1x16x128xi32>
    %c0_i32_5 = arith.constant 0 : i32
    %8 = vector.broadcast %c0_i32_5 : i32 to vector<1x16x128xi32>
    %9 = arith.cmpi ne, %7, %8 : vector<1x16x128xi32>
    %c0_i32_6 = arith.constant 0 : i32
    %10 = vector.broadcast %c0_i32_6 : i32 to vector<1x16x128xi32>
    %11 = arith.cmpi slt, %7, %10 : vector<1x16x128xi32>
    %c0_i32_7 = arith.constant 0 : i32
    %12 = arith.cmpi slt, %5, %c0_i32_7 : i32
    %13 = vector.broadcast %12 : i1 to vector<1x16x128xi1>
    %14 = vector.broadcast %13 : vector<1x16x128xi1> to vector<1x16x128xi1>
    %15 = arith.xori %11, %14 : vector<1x16x128xi1>
    %16 = arith.andi %15, %9 : vector<1x16x128xi1>
    %17 = vector.broadcast %5 : i32 to vector<1x16x128xi32>
    %18 = arith.addi %7, %17 : vector<1x16x128xi32>
    %19 = arith.select %16, %18, %7 : vector<1x16x128xi1>, vector<1x16x128xi32>
    %c1_i32_8 = arith.constant 1 : i32
    %20 = vector.broadcast %c1_i32_8 : i32 to vector<1x16x128xi32>
    %21 = arith.cmpi sge, %2, %20 : vector<1x16x128xi32>
    %c14_i32 = arith.constant 14 : i32
    %22 = vector.broadcast %c14_i32 : i32 to vector<1x16x128xi32>
    %23 = arith.cmpi sle, %2, %22 : vector<1x16x128xi32>
    %c1_i32_9 = arith.constant 1 : i32
    %24 = vector.broadcast %c1_i32_9 : i32 to vector<1x16x128xi32>
    %25 = arith.cmpi sge, %19, %24 : vector<1x16x128xi32>
    %c14_i32_10 = arith.constant 14 : i32
    %26 = vector.broadcast %c14_i32_10 : i32 to vector<1x16x128xi32>
    %27 = arith.cmpi sle, %19, %26 : vector<1x16x128xi32>
    %28 = vector.extract_strided_slice %1 {offsets = [0, 15, 0], sizes = [1, 1, 128], strides = [1, 1, 1]} : vector<1x16x128xf32> to vector<1x1x128xf32>
    %29 = vector.extract_strided_slice %1 {offsets = [0, 0, 0], sizes = [1, 15, 128], strides = [1, 1, 1]} : vector<1x16x128xf32> to vector<1x15x128xf32>
    %30 = tpu.concatenate %28, %29 in 1 : vector<1x1x128xf32>, vector<1x15x128xf32> -> vector<1x16x128xf32>
    %cst = arith.constant 0x7F800000 : f32
    %31 = vector.broadcast %cst : f32 to vector<1x16x128xf32>
    %32 = arith.select %21, %30, %31 : vector<1x16x128xi1>, vector<1x16x128xf32>
    %33 = vector.extract_strided_slice %1 {offsets = [0, 1, 0], sizes = [1, 15, 128], strides = [1, 1, 1]} : vector<1x16x128xf32> to vector<1x15x128xf32>
    %34 = vector.extract_strided_slice %1 {offsets = [0, 0, 0], sizes = [1, 1, 128], strides = [1, 1, 1]} : vector<1x16x128xf32> to vector<1x1x128xf32>
    %35 = tpu.concatenate %33, %34 in 1 : vector<1x15x128xf32>, vector<1x1x128xf32> -> vector<1x16x128xf32>
    %cst_11 = arith.constant 0x7F800000 : f32
    %36 = vector.broadcast %cst_11 : f32 to vector<1x16x128xf32>
    %37 = arith.select %23, %35, %36 : vector<1x16x128xi1>, vector<1x16x128xf32>
    %38 = vector.extract_strided_slice %1 {offsets = [0, 0, 127], sizes = [1, 16, 1], strides = [1, 1, 1]} : vector<1x16x128xf32> to vector<1x16x1xf32>
    %39 = vector.extract_strided_slice %1 {offsets = [0, 0, 0], sizes = [1, 16, 127], strides = [1, 1, 1]} : vector<1x16x128xf32> to vector<1x16x127xf32>
    %40 = tpu.concatenate %38, %39 in 2 : vector<1x16x1xf32>, vector<1x16x127xf32> -> vector<1x16x128xf32>
    %cst_12 = arith.constant 0x7F800000 : f32
    %41 = vector.broadcast %cst_12 : f32 to vector<1x16x128xf32>
    %42 = arith.select %25, %40, %41 : vector<1x16x128xi1>, vector<1x16x128xf32>
    %43 = vector.extract_strided_slice %1 {offsets = [0, 0, 1], sizes = [1, 16, 127], strides = [1, 1, 1]} : vector<1x16x128xf32> to vector<1x16x127xf32>
    %44 = vector.extract_strided_slice %1 {offsets = [0, 0, 0], sizes = [1, 16, 1], strides = [1, 1, 1]} : vector<1x16x128xf32> to vector<1x16x1xf32>
    %45 = tpu.concatenate %43, %44 in 2 : vector<1x16x127xf32>, vector<1x16x1xf32> -> vector<1x16x128xf32>
    %cst_13 = arith.constant 0x7F800000 : f32
    %46 = vector.broadcast %cst_13 : f32 to vector<1x16x128xf32>
    %47 = arith.select %27, %45, %46 : vector<1x16x128xi1>, vector<1x16x128xf32>
    %48 = arith.minimumf %32, %37 : vector<1x16x128xf32>
    %49 = arith.minimumf %42, %47 : vector<1x16x128xf32>
    %50 = arith.minimumf %48, %49 : vector<1x16x128xf32>
    %51 = arith.minimumf %50, %1 : vector<1x16x128xf32>
    %52 = vector.extract_strided_slice %51 {offsets = [0, 15, 0], sizes = [1, 1, 128], strides = [1, 1, 1]} : vector<1x16x128xf32> to vector<1x1x128xf32>
    %53 = vector.extract_strided_slice %51 {offsets = [0, 0, 0], sizes = [1, 15, 128], strides = [1, 1, 1]} : vector<1x16x128xf32> to vector<1x15x128xf32>
    %54 = tpu.concatenate %52, %53 in 1 : vector<1x1x128xf32>, vector<1x15x128xf32> -> vector<1x16x128xf32>
    %cst_14 = arith.constant 0xFF800000 : f32
    %55 = vector.broadcast %cst_14 : f32 to vector<1x16x128xf32>
    %56 = arith.select %21, %54, %55 : vector<1x16x128xi1>, vector<1x16x128xf32>
    %57 = vector.extract_strided_slice %51 {offsets = [0, 1, 0], sizes = [1, 15, 128], strides = [1, 1, 1]} : vector<1x16x128xf32> to vector<1x15x128xf32>
    %58 = vector.extract_strided_slice %51 {offsets = [0, 0, 0], sizes = [1, 1, 128], strides = [1, 1, 1]} : vector<1x16x128xf32> to vector<1x1x128xf32>
    %59 = tpu.concatenate %57, %58 in 1 : vector<1x15x128xf32>, vector<1x1x128xf32> -> vector<1x16x128xf32>
    %cst_15 = arith.constant 0xFF800000 : f32
    %60 = vector.broadcast %cst_15 : f32 to vector<1x16x128xf32>
    %61 = arith.select %23, %59, %60 : vector<1x16x128xi1>, vector<1x16x128xf32>
    %62 = arith.maximumf %56, %61 : vector<1x16x128xf32>
    %63 = arith.maximumf %62, %51 : vector<1x16x128xf32>
    %64 = vector.extract_strided_slice %63 {offsets = [0, 0, 127], sizes = [1, 16, 1], strides = [1, 1, 1]} : vector<1x16x128xf32> to vector<1x16x1xf32>
    %65 = vector.extract_strided_slice %63 {offsets = [0, 0, 0], sizes = [1, 16, 127], strides = [1, 1, 1]} : vector<1x16x128xf32> to vector<1x16x127xf32>
    %66 = tpu.concatenate %64, %65 in 2 : vector<1x16x1xf32>, vector<1x16x127xf32> -> vector<1x16x128xf32>
    %cst_16 = arith.constant 0xFF800000 : f32
    %67 = vector.broadcast %cst_16 : f32 to vector<1x16x128xf32>
    %68 = arith.select %25, %66, %67 : vector<1x16x128xi1>, vector<1x16x128xf32>
    %69 = vector.extract_strided_slice %63 {offsets = [0, 0, 1], sizes = [1, 16, 127], strides = [1, 1, 1]} : vector<1x16x128xf32> to vector<1x16x127xf32>
    %70 = vector.extract_strided_slice %63 {offsets = [0, 0, 0], sizes = [1, 16, 1], strides = [1, 1, 1]} : vector<1x16x128xf32> to vector<1x16x1xf32>
    %71 = tpu.concatenate %69, %70 in 2 : vector<1x16x127xf32>, vector<1x16x1xf32> -> vector<1x16x128xf32>
    %cst_17 = arith.constant 0xFF800000 : f32
    %72 = vector.broadcast %cst_17 : f32 to vector<1x16x128xf32>
    %73 = arith.select %27, %71, %72 : vector<1x16x128xi1>, vector<1x16x128xf32>
    %74 = arith.maximumf %68, %73 : vector<1x16x128xf32>
    %75 = arith.maximumf %74, %63 : vector<1x16x128xf32>
    %76 = arith.subf %1, %75 : vector<1x16x128xf32>
    %cst_18 = arith.constant 0.000000e+00 : f32
    %77 = vector.broadcast %cst_18 : f32 to vector<1x16x128xf32>
    %78 = arith.maximumf %76, %77 : vector<1x16x128xf32>
    %79 = vector.extract_strided_slice %1 {offsets = [0, 15, 0], sizes = [1, 1, 128], strides = [1, 1, 1]} : vector<1x16x128xf32> to vector<1x1x128xf32>
    %80 = vector.extract_strided_slice %1 {offsets = [0, 0, 0], sizes = [1, 15, 128], strides = [1, 1, 1]} : vector<1x16x128xf32> to vector<1x15x128xf32>
    %81 = tpu.concatenate %79, %80 in 1 : vector<1x1x128xf32>, vector<1x15x128xf32> -> vector<1x16x128xf32>
    %cst_19 = arith.constant 0x7F800000 : f32
    %82 = vector.broadcast %cst_19 : f32 to vector<1x16x128xf32>
    %83 = arith.select %21, %81, %82 : vector<1x16x128xi1>, vector<1x16x128xf32>
    %84 = vector.extract_strided_slice %1 {offsets = [0, 1, 0], sizes = [1, 15, 128], strides = [1, 1, 1]} : vector<1x16x128xf32> to vector<1x15x128xf32>
    %85 = vector.extract_strided_slice %1 {offsets = [0, 0, 0], sizes = [1, 1, 128], strides = [1, 1, 1]} : vector<1x16x128xf32> to vector<1x1x128xf32>
    %86 = tpu.concatenate %84, %85 in 1 : vector<1x15x128xf32>, vector<1x1x128xf32> -> vector<1x16x128xf32>
    %cst_20 = arith.constant 0x7F800000 : f32
    %87 = vector.broadcast %cst_20 : f32 to vector<1x16x128xf32>
    %88 = arith.select %23, %86, %87 : vector<1x16x128xi1>, vector<1x16x128xf32>
    %89 = vector.extract_strided_slice %1 {offsets = [0, 0, 127], sizes = [1, 16, 1], strides = [1, 1, 1]} : vector<1x16x128xf32> to vector<1x16x1xf32>
    %90 = vector.extract_strided_slice %1 {offsets = [0, 0, 0], sizes = [1, 16, 127], strides = [1, 1, 1]} : vector<1x16x128xf32> to vector<1x16x127xf32>
    %91 = tpu.concatenate %89, %90 in 2 : vector<1x16x1xf32>, vector<1x16x127xf32> -> vector<1x16x128xf32>
    %cst_21 = arith.constant 0x7F800000 : f32
    %92 = vector.broadcast %cst_21 : f32 to vector<1x16x128xf32>
    %93 = arith.select %25, %91, %92 : vector<1x16x128xi1>, vector<1x16x128xf32>
    %94 = vector.extract_strided_slice %1 {offsets = [0, 0, 1], sizes = [1, 16, 127], strides = [1, 1, 1]} : vector<1x16x128xf32> to vector<1x16x127xf32>
    %95 = vector.extract_strided_slice %1 {offsets = [0, 0, 0], sizes = [1, 16, 1], strides = [1, 1, 1]} : vector<1x16x128xf32> to vector<1x16x1xf32>
    %96 = tpu.concatenate %94, %95 in 2 : vector<1x16x127xf32>, vector<1x16x1xf32> -> vector<1x16x128xf32>
    %cst_22 = arith.constant 0x7F800000 : f32
    %97 = vector.broadcast %cst_22 : f32 to vector<1x16x128xf32>
    %98 = arith.select %27, %96, %97 : vector<1x16x128xi1>, vector<1x16x128xf32>
    %99 = arith.minimumf %83, %88 : vector<1x16x128xf32>
    %100 = arith.minimumf %93, %98 : vector<1x16x128xf32>
    %101 = arith.minimumf %99, %100 : vector<1x16x128xf32>
    %102 = arith.minimumf %101, %1 : vector<1x16x128xf32>
    %103 = vector.extract_strided_slice %102 {offsets = [0, 15, 0], sizes = [1, 1, 128], strides = [1, 1, 1]} : vector<1x16x128xf32> to vector<1x1x128xf32>
    %104 = vector.extract_strided_slice %102 {offsets = [0, 0, 0], sizes = [1, 15, 128], strides = [1, 1, 1]} : vector<1x16x128xf32> to vector<1x15x128xf32>
    %105 = tpu.concatenate %103, %104 in 1 : vector<1x1x128xf32>, vector<1x15x128xf32> -> vector<1x16x128xf32>
    %cst_23 = arith.constant 0x7F800000 : f32
    %106 = vector.broadcast %cst_23 : f32 to vector<1x16x128xf32>
    %107 = arith.select %21, %105, %106 : vector<1x16x128xi1>, vector<1x16x128xf32>
    %108 = vector.extract_strided_slice %102 {offsets = [0, 1, 0], sizes = [1, 15, 128], strides = [1, 1, 1]} : vector<1x16x128xf32> to vector<1x15x128xf32>
    %109 = vector.extract_strided_slice %102 {offsets = [0, 0, 0], sizes = [1, 1, 128], strides = [1, 1, 1]} : vector<1x16x128xf32> to vector<1x1x128xf32>
    %110 = tpu.concatenate %108, %109 in 1 : vector<1x15x128xf32>, vector<1x1x128xf32> -> vector<1x16x128xf32>
    %cst_24 = arith.constant 0x7F800000 : f32
    %111 = vector.broadcast %cst_24 : f32 to vector<1x16x128xf32>
    %112 = arith.select %23, %110, %111 : vector<1x16x128xi1>, vector<1x16x128xf32>
    %113 = vector.extract_strided_slice %102 {offsets = [0, 0, 127], sizes = [1, 16, 1], strides = [1, 1, 1]} : vector<1x16x128xf32> to vector<1x16x1xf32>
    %114 = vector.extract_strided_slice %102 {offsets = [0, 0, 0], sizes = [1, 16, 127], strides = [1, 1, 1]} : vector<1x16x128xf32> to vector<1x16x127xf32>
    %115 = tpu.concatenate %113, %114 in 2 : vector<1x16x1xf32>, vector<1x16x127xf32> -> vector<1x16x128xf32>
    %cst_25 = arith.constant 0x7F800000 : f32
    %116 = vector.broadcast %cst_25 : f32 to vector<1x16x128xf32>
    %117 = arith.select %25, %115, %116 : vector<1x16x128xi1>, vector<1x16x128xf32>
    %118 = vector.extract_strided_slice %102 {offsets = [0, 0, 1], sizes = [1, 16, 127], strides = [1, 1, 1]} : vector<1x16x128xf32> to vector<1x16x127xf32>
    %119 = vector.extract_strided_slice %102 {offsets = [0, 0, 0], sizes = [1, 16, 1], strides = [1, 1, 1]} : vector<1x16x128xf32> to vector<1x16x1xf32>
    %120 = tpu.concatenate %118, %119 in 2 : vector<1x16x127xf32>, vector<1x16x1xf32> -> vector<1x16x128xf32>
    %cst_26 = arith.constant 0x7F800000 : f32
    %121 = vector.broadcast %cst_26 : f32 to vector<1x16x128xf32>
    %122 = arith.select %27, %120, %121 : vector<1x16x128xi1>, vector<1x16x128xf32>
    %123 = arith.minimumf %107, %112 : vector<1x16x128xf32>
    %124 = arith.minimumf %117, %122 : vector<1x16x128xf32>
    %125 = arith.minimumf %123, %124 : vector<1x16x128xf32>
    %126 = arith.minimumf %125, %102 : vector<1x16x128xf32>
    %127 = vector.extract_strided_slice %126 {offsets = [0, 15, 0], sizes = [1, 1, 128], strides = [1, 1, 1]} : vector<1x16x128xf32> to vector<1x1x128xf32>
    %128 = vector.extract_strided_slice %126 {offsets = [0, 0, 0], sizes = [1, 15, 128], strides = [1, 1, 1]} : vector<1x16x128xf32> to vector<1x15x128xf32>
    %129 = tpu.concatenate %127, %128 in 1 : vector<1x1x128xf32>, vector<1x15x128xf32> -> vector<1x16x128xf32>
    %cst_27 = arith.constant 0xFF800000 : f32
    %130 = vector.broadcast %cst_27 : f32 to vector<1x16x128xf32>
    %131 = arith.select %21, %129, %130 : vector<1x16x128xi1>, vector<1x16x128xf32>
    %132 = vector.extract_strided_slice %126 {offsets = [0, 1, 0], sizes = [1, 15, 128], strides = [1, 1, 1]} : vector<1x16x128xf32> to vector<1x15x128xf32>
    %133 = vector.extract_strided_slice %126 {offsets = [0, 0, 0], sizes = [1, 1, 128], strides = [1, 1, 1]} : vector<1x16x128xf32> to vector<1x1x128xf32>
    %134 = tpu.concatenate %132, %133 in 1 : vector<1x15x128xf32>, vector<1x1x128xf32> -> vector<1x16x128xf32>
    %cst_28 = arith.constant 0xFF800000 : f32
    %135 = vector.broadcast %cst_28 : f32 to vector<1x16x128xf32>
    %136 = arith.select %23, %134, %135 : vector<1x16x128xi1>, vector<1x16x128xf32>
    %137 = arith.maximumf %131, %136 : vector<1x16x128xf32>
    %138 = arith.maximumf %137, %126 : vector<1x16x128xf32>
    %139 = vector.extract_strided_slice %138 {offsets = [0, 0, 127], sizes = [1, 16, 1], strides = [1, 1, 1]} : vector<1x16x128xf32> to vector<1x16x1xf32>
    %140 = vector.extract_strided_slice %138 {offsets = [0, 0, 0], sizes = [1, 16, 127], strides = [1, 1, 1]} : vector<1x16x128xf32> to vector<1x16x127xf32>
    %141 = tpu.concatenate %139, %140 in 2 : vector<1x16x1xf32>, vector<1x16x127xf32> -> vector<1x16x128xf32>
    %cst_29 = arith.constant 0xFF800000 : f32
    %142 = vector.broadcast %cst_29 : f32 to vector<1x16x128xf32>
    %143 = arith.select %25, %141, %142 : vector<1x16x128xi1>, vector<1x16x128xf32>
    %144 = vector.extract_strided_slice %138 {offsets = [0, 0, 1], sizes = [1, 16, 127], strides = [1, 1, 1]} : vector<1x16x128xf32> to vector<1x16x127xf32>
    %145 = vector.extract_strided_slice %138 {offsets = [0, 0, 0], sizes = [1, 16, 1], strides = [1, 1, 1]} : vector<1x16x128xf32> to vector<1x16x1xf32>
    %146 = tpu.concatenate %144, %145 in 2 : vector<1x16x127xf32>, vector<1x16x1xf32> -> vector<1x16x128xf32>
    %cst_30 = arith.constant 0xFF800000 : f32
    %147 = vector.broadcast %cst_30 : f32 to vector<1x16x128xf32>
    %148 = arith.select %27, %146, %147 : vector<1x16x128xi1>, vector<1x16x128xf32>
    %149 = arith.maximumf %143, %148 : vector<1x16x128xf32>
    %150 = arith.maximumf %149, %138 : vector<1x16x128xf32>
    %151 = arith.subf %102, %150 : vector<1x16x128xf32>
    %cst_31 = arith.constant 0.000000e+00 : f32
    %152 = vector.broadcast %cst_31 : f32 to vector<1x16x128xf32>
    %153 = arith.maximumf %151, %152 : vector<1x16x128xf32>
    %154 = arith.mulf %78, %153 : vector<1x16x128xf32>
    %155 = arith.subf %153, %154 : vector<1x16x128xf32>
    %cst_32 = arith.constant 0.000000e+00 : f32
    %156 = vector.broadcast %cst_32 : f32 to vector<1x16x128xf32>
    %157 = arith.maximumf %155, %156 : vector<1x16x128xf32>
    %158 = arith.addf %78, %157 : vector<1x16x128xf32>
    %159 = vector.extract_strided_slice %102 {offsets = [0, 15, 0], sizes = [1, 1, 128], strides = [1, 1, 1]} : vector<1x16x128xf32> to vector<1x1x128xf32>
    %160 = vector.extract_strided_slice %102 {offsets = [0, 0, 0], sizes = [1, 15, 128], strides = [1, 1, 1]} : vector<1x16x128xf32> to vector<1x15x128xf32>
    %161 = tpu.concatenate %159, %160 in 1 : vector<1x1x128xf32>, vector<1x15x128xf32> -> vector<1x16x128xf32>
    %cst_33 = arith.constant 0x7F800000 : f32
    %162 = vector.broadcast %cst_33 : f32 to vector<1x16x128xf32>
    %163 = arith.select %21, %161, %162 : vector<1x16x128xi1>, vector<1x16x128xf32>
    %164 = vector.extract_strided_slice %102 {offsets = [0, 1, 0], sizes = [1, 15, 128], strides = [1, 1, 1]} : vector<1x16x128xf32> to vector<1x15x128xf32>
    %165 = vector.extract_strided_slice %102 {offsets = [0, 0, 0], sizes = [1, 1, 128], strides = [1, 1, 1]} : vector<1x16x128xf32> to vector<1x1x128xf32>
    %166 = tpu.concatenate %164, %165 in 1 : vector<1x15x128xf32>, vector<1x1x128xf32> -> vector<1x16x128xf32>
    %cst_34 = arith.constant 0x7F800000 : f32
    %167 = vector.broadcast %cst_34 : f32 to vector<1x16x128xf32>
    %168 = arith.select %23, %166, %167 : vector<1x16x128xi1>, vector<1x16x128xf32>
    %169 = vector.extract_strided_slice %102 {offsets = [0, 0, 127], sizes = [1, 16, 1], strides = [1, 1, 1]} : vector<1x16x128xf32> to vector<1x16x1xf32>
    %170 = vector.extract_strided_slice %102 {offsets = [0, 0, 0], sizes = [1, 16, 127], strides = [1, 1, 1]} : vector<1x16x128xf32> to vector<1x16x127xf32>
    %171 = tpu.concatenate %169, %170 in 2 : vector<1x16x1xf32>, vector<1x16x127xf32> -> vector<1x16x128xf32>
    %cst_35 = arith.constant 0x7F800000 : f32
    %172 = vector.broadcast %cst_35 : f32 to vector<1x16x128xf32>
    %173 = arith.select %25, %171, %172 : vector<1x16x128xi1>, vector<1x16x128xf32>
    %174 = vector.extract_strided_slice %102 {offsets = [0, 0, 1], sizes = [1, 16, 127], strides = [1, 1, 1]} : vector<1x16x128xf32> to vector<1x16x127xf32>
    %175 = vector.extract_strided_slice %102 {offsets = [0, 0, 0], sizes = [1, 16, 1], strides = [1, 1, 1]} : vector<1x16x128xf32> to vector<1x16x1xf32>
    %176 = tpu.concatenate %174, %175 in 2 : vector<1x16x127xf32>, vector<1x16x1xf32> -> vector<1x16x128xf32>
    %cst_36 = arith.constant 0x7F800000 : f32
    %177 = vector.broadcast %cst_36 : f32 to vector<1x16x128xf32>
    %178 = arith.select %27, %176, %177 : vector<1x16x128xi1>, vector<1x16x128xf32>
    %179 = arith.minimumf %163, %168 : vector<1x16x128xf32>
    %180 = arith.minimumf %173, %178 : vector<1x16x128xf32>
    %181 = arith.minimumf %179, %180 : vector<1x16x128xf32>
    %182 = arith.minimumf %181, %102 : vector<1x16x128xf32>
    %183 = vector.extract_strided_slice %182 {offsets = [0, 15, 0], sizes = [1, 1, 128], strides = [1, 1, 1]} : vector<1x16x128xf32> to vector<1x1x128xf32>
    %184 = vector.extract_strided_slice %182 {offsets = [0, 0, 0], sizes = [1, 15, 128], strides = [1, 1, 1]} : vector<1x16x128xf32> to vector<1x15x128xf32>
    %185 = tpu.concatenate %183, %184 in 1 : vector<1x1x128xf32>, vector<1x15x128xf32> -> vector<1x16x128xf32>
    %cst_37 = arith.constant 0x7F800000 : f32
    %186 = vector.broadcast %cst_37 : f32 to vector<1x16x128xf32>
    %187 = arith.select %21, %185, %186 : vector<1x16x128xi1>, vector<1x16x128xf32>
    %188 = vector.extract_strided_slice %182 {offsets = [0, 1, 0], sizes = [1, 15, 128], strides = [1, 1, 1]} : vector<1x16x128xf32> to vector<1x15x128xf32>
    %189 = vector.extract_strided_slice %182 {offsets = [0, 0, 0], sizes = [1, 1, 128], strides = [1, 1, 1]} : vector<1x16x128xf32> to vector<1x1x128xf32>
    %190 = tpu.concatenate %188, %189 in 1 : vector<1x15x128xf32>, vector<1x1x128xf32> -> vector<1x16x128xf32>
    %cst_38 = arith.constant 0x7F800000 : f32
    %191 = vector.broadcast %cst_38 : f32 to vector<1x16x128xf32>
    %192 = arith.select %23, %190, %191 : vector<1x16x128xi1>, vector<1x16x128xf32>
    %193 = vector.extract_strided_slice %182 {offsets = [0, 0, 127], sizes = [1, 16, 1], strides = [1, 1, 1]} : vector<1x16x128xf32> to vector<1x16x1xf32>
    %194 = vector.extract_strided_slice %182 {offsets = [0, 0, 0], sizes = [1, 16, 127], strides = [1, 1, 1]} : vector<1x16x128xf32> to vector<1x16x127xf32>
    %195 = tpu.concatenate %193, %194 in 2 : vector<1x16x1xf32>, vector<1x16x127xf32> -> vector<1x16x128xf32>
    %cst_39 = arith.constant 0x7F800000 : f32
    %196 = vector.broadcast %cst_39 : f32 to vector<1x16x128xf32>
    %197 = arith.select %25, %195, %196 : vector<1x16x128xi1>, vector<1x16x128xf32>
    %198 = vector.extract_strided_slice %182 {offsets = [0, 0, 1], sizes = [1, 16, 127], strides = [1, 1, 1]} : vector<1x16x128xf32> to vector<1x16x127xf32>
    %199 = vector.extract_strided_slice %182 {offsets = [0, 0, 0], sizes = [1, 16, 1], strides = [1, 1, 1]} : vector<1x16x128xf32> to vector<1x16x1xf32>
    %200 = tpu.concatenate %198, %199 in 2 : vector<1x16x127xf32>, vector<1x16x1xf32> -> vector<1x16x128xf32>
    %cst_40 = arith.constant 0x7F800000 : f32
    %201 = vector.broadcast %cst_40 : f32 to vector<1x16x128xf32>
    %202 = arith.select %27, %200, %201 : vector<1x16x128xi1>, vector<1x16x128xf32>
    %203 = arith.minimumf %187, %192 : vector<1x16x128xf32>
    %204 = arith.minimumf %197, %202 : vector<1x16x128xf32>
    %205 = arith.minimumf %203, %204 : vector<1x16x128xf32>
    %206 = arith.minimumf %205, %182 : vector<1x16x128xf32>
    %207 = vector.extract_strided_slice %206 {offsets = [0, 15, 0], sizes = [1, 1, 128], strides = [1, 1, 1]} : vector<1x16x128xf32> to vector<1x1x128xf32>
    %208 = vector.extract_strided_slice %206 {offsets = [0, 0, 0], sizes = [1, 15, 128], strides = [1, 1, 1]} : vector<1x16x128xf32> to vector<1x15x128xf32>
    %209 = tpu.concatenate %207, %208 in 1 : vector<1x1x128xf32>, vector<1x15x128xf32> -> vector<1x16x128xf32>
    %cst_41 = arith.constant 0xFF800000 : f32
    %210 = vector.broadcast %cst_41 : f32 to vector<1x16x128xf32>
    %211 = arith.select %21, %209, %210 : vector<1x16x128xi1>, vector<1x16x128xf32>
    %212 = vector.extract_strided_slice %206 {offsets = [0, 1, 0], sizes = [1, 15, 128], strides = [1, 1, 1]} : vector<1x16x128xf32> to vector<1x15x128xf32>
    %213 = vector.extract_strided_slice %206 {offsets = [0, 0, 0], sizes = [1, 1, 128], strides = [1, 1, 1]} : vector<1x16x128xf32> to vector<1x1x128xf32>
    %214 = tpu.concatenate %212, %213 in 1 : vector<1x15x128xf32>, vector<1x1x128xf32> -> vector<1x16x128xf32>
    %cst_42 = arith.constant 0xFF800000 : f32
    %215 = vector.broadcast %cst_42 : f32 to vector<1x16x128xf32>
    %216 = arith.select %23, %214, %215 : vector<1x16x128xi1>, vector<1x16x128xf32>
    %217 = arith.maximumf %211, %216 : vector<1x16x128xf32>
    %218 = arith.maximumf %217, %206 : vector<1x16x128xf32>
    %219 = vector.extract_strided_slice %218 {offsets = [0, 0, 127], sizes = [1, 16, 1], strides = [1, 1, 1]} : vector<1x16x128xf32> to vector<1x16x1xf32>
    %220 = vector.extract_strided_slice %218 {offsets = [0, 0, 0], sizes = [1, 16, 127], strides = [1, 1, 1]} : vector<1x16x128xf32> to vector<1x16x127xf32>
    %221 = tpu.concatenate %219, %220 in 2 : vector<1x16x1xf32>, vector<1x16x127xf32> -> vector<1x16x128xf32>
    %cst_43 = arith.constant 0xFF800000 : f32
    %222 = vector.broadcast %cst_43 : f32 to vector<1x16x128xf32>
    %223 = arith.select %25, %221, %222 : vector<1x16x128xi1>, vector<1x16x128xf32>
    %224 = vector.extract_strided_slice %218 {offsets = [0, 0, 1], sizes = [1, 16, 127], strides = [1, 1, 1]} : vector<1x16x128xf32> to vector<1x16x127xf32>
    %225 = vector.extract_strided_slice %218 {offsets = [0, 0, 0], sizes = [1, 16, 1], strides = [1, 1, 1]} : vector<1x16x128xf32> to vector<1x16x1xf32>
    %226 = tpu.concatenate %224, %225 in 2 : vector<1x16x127xf32>, vector<1x16x1xf32> -> vector<1x16x128xf32>
    %cst_44 = arith.constant 0xFF800000 : f32
    %227 = vector.broadcast %cst_44 : f32 to vector<1x16x128xf32>
    %228 = arith.select %27, %226, %227 : vector<1x16x128xi1>, vector<1x16x128xf32>
    %229 = arith.maximumf %223, %228 : vector<1x16x128xf32>
    %230 = arith.maximumf %229, %218 : vector<1x16x128xf32>
    %231 = arith.subf %182, %230 : vector<1x16x128xf32>
    %cst_45 = arith.constant 0.000000e+00 : f32
    %232 = vector.broadcast %cst_45 : f32 to vector<1x16x128xf32>
    %233 = arith.maximumf %231, %232 : vector<1x16x128xf32>
    %234 = arith.mulf %158, %233 : vector<1x16x128xf32>
    %235 = arith.subf %233, %234 : vector<1x16x128xf32>
    %cst_46 = arith.constant 0.000000e+00 : f32
    %236 = vector.broadcast %cst_46 : f32 to vector<1x16x128xf32>
    %237 = arith.maximumf %235, %236 : vector<1x16x128xf32>
    %238 = arith.addf %158, %237 : vector<1x16x128xf32>
    %239 = vector.extract_strided_slice %182 {offsets = [0, 15, 0], sizes = [1, 1, 128], strides = [1, 1, 1]} : vector<1x16x128xf32> to vector<1x1x128xf32>
    %240 = vector.extract_strided_slice %182 {offsets = [0, 0, 0], sizes = [1, 15, 128], strides = [1, 1, 1]} : vector<1x16x128xf32> to vector<1x15x128xf32>
    %241 = tpu.concatenate %239, %240 in 1 : vector<1x1x128xf32>, vector<1x15x128xf32> -> vector<1x16x128xf32>
    %cst_47 = arith.constant 0x7F800000 : f32
    %242 = vector.broadcast %cst_47 : f32 to vector<1x16x128xf32>
    %243 = arith.select %21, %241, %242 : vector<1x16x128xi1>, vector<1x16x128xf32>
    %244 = vector.extract_strided_slice %182 {offsets = [0, 1, 0], sizes = [1, 15, 128], strides = [1, 1, 1]} : vector<1x16x128xf32> to vector<1x15x128xf32>
    %245 = vector.extract_strided_slice %182 {offsets = [0, 0, 0], sizes = [1, 1, 128], strides = [1, 1, 1]} : vector<1x16x128xf32> to vector<1x1x128xf32>
    %246 = tpu.concatenate %244, %245 in 1 : vector<1x15x128xf32>, vector<1x1x128xf32> -> vector<1x16x128xf32>
    %cst_48 = arith.constant 0x7F800000 : f32
    %247 = vector.broadcast %cst_48 : f32 to vector<1x16x128xf32>
    %248 = arith.select %23, %246, %247 : vector<1x16x128xi1>, vector<1x16x128xf32>
    %249 = vector.extract_strided_slice %182 {offsets = [0, 0, 127], sizes = [1, 16, 1], strides = [1, 1, 1]} : vector<1x16x128xf32> to vector<1x16x1xf32>
    %250 = vector.extract_strided_slice %182 {offsets = [0, 0, 0], sizes = [1, 16, 127], strides = [1, 1, 1]} : vector<1x16x128xf32> to vector<1x16x127xf32>
    %251 = tpu.concatenate %249, %250 in 2 : vector<1x16x1xf32>, vector<1x16x127xf32> -> vector<1x16x128xf32>
    %cst_49 = arith.constant 0x7F800000 : f32
    %252 = vector.broadcast %cst_49 : f32 to vector<1x16x128xf32>
    %253 = arith.select %25, %251, %252 : vector<1x16x128xi1>, vector<1x16x128xf32>
    %254 = vector.extract_strided_slice %182 {offsets = [0, 0, 1], sizes = [1, 16, 127], strides = [1, 1, 1]} : vector<1x16x128xf32> to vector<1x16x127xf32>
    %255 = vector.extract_strided_slice %182 {offsets = [0, 0, 0], sizes = [1, 16, 1], strides = [1, 1, 1]} : vector<1x16x128xf32> to vector<1x16x1xf32>
    %256 = tpu.concatenate %254, %255 in 2 : vector<1x16x127xf32>, vector<1x16x1xf32> -> vector<1x16x128xf32>
    %cst_50 = arith.constant 0x7F800000 : f32
    %257 = vector.broadcast %cst_50 : f32 to vector<1x16x128xf32>
    %258 = arith.select %27, %256, %257 : vector<1x16x128xi1>, vector<1x16x128xf32>
    %259 = arith.minimumf %243, %248 : vector<1x16x128xf32>
    %260 = arith.minimumf %253, %258 : vector<1x16x128xf32>
    %261 = arith.minimumf %259, %260 : vector<1x16x128xf32>
    %262 = arith.minimumf %261, %182 : vector<1x16x128xf32>
    %263 = vector.extract_strided_slice %262 {offsets = [0, 15, 0], sizes = [1, 1, 128], strides = [1, 1, 1]} : vector<1x16x128xf32> to vector<1x1x128xf32>
    %264 = vector.extract_strided_slice %262 {offsets = [0, 0, 0], sizes = [1, 15, 128], strides = [1, 1, 1]} : vector<1x16x128xf32> to vector<1x15x128xf32>
    %265 = tpu.concatenate %263, %264 in 1 : vector<1x1x128xf32>, vector<1x15x128xf32> -> vector<1x16x128xf32>
    %cst_51 = arith.constant 0x7F800000 : f32
    %266 = vector.broadcast %cst_51 : f32 to vector<1x16x128xf32>
    %267 = arith.select %21, %265, %266 : vector<1x16x128xi1>, vector<1x16x128xf32>
    %268 = vector.extract_strided_slice %262 {offsets = [0, 1, 0], sizes = [1, 15, 128], strides = [1, 1, 1]} : vector<1x16x128xf32> to vector<1x15x128xf32>
    %269 = vector.extract_strided_slice %262 {offsets = [0, 0, 0], sizes = [1, 1, 128], strides = [1, 1, 1]} : vector<1x16x128xf32> to vector<1x1x128xf32>
    %270 = tpu.concatenate %268, %269 in 1 : vector<1x15x128xf32>, vector<1x1x128xf32> -> vector<1x16x128xf32>
    %cst_52 = arith.constant 0x7F800000 : f32
    %271 = vector.broadcast %cst_52 : f32 to vector<1x16x128xf32>
    %272 = arith.select %23, %270, %271 : vector<1x16x128xi1>, vector<1x16x128xf32>
    %273 = vector.extract_strided_slice %262 {offsets = [0, 0, 127], sizes = [1, 16, 1], strides = [1, 1, 1]} : vector<1x16x128xf32> to vector<1x16x1xf32>
    %274 = vector.extract_strided_slice %262 {offsets = [0, 0, 0], sizes = [1, 16, 127], strides = [1, 1, 1]} : vector<1x16x128xf32> to vector<1x16x127xf32>
    %275 = tpu.concatenate %273, %274 in 2 : vector<1x16x1xf32>, vector<1x16x127xf32> -> vector<1x16x128xf32>
    %cst_53 = arith.constant 0x7F800000 : f32
    %276 = vector.broadcast %cst_53 : f32 to vector<1x16x128xf32>
    %277 = arith.select %25, %275, %276 : vector<1x16x128xi1>, vector<1x16x128xf32>
    %278 = vector.extract_strided_slice %262 {offsets = [0, 0, 1], sizes = [1, 16, 127], strides = [1, 1, 1]} : vector<1x16x128xf32> to vector<1x16x127xf32>
    %279 = vector.extract_strided_slice %262 {offsets = [0, 0, 0], sizes = [1, 16, 1], strides = [1, 1, 1]} : vector<1x16x128xf32> to vector<1x16x1xf32>
    %280 = tpu.concatenate %278, %279 in 2 : vector<1x16x127xf32>, vector<1x16x1xf32> -> vector<1x16x128xf32>
    %cst_54 = arith.constant 0x7F800000 : f32
    %281 = vector.broadcast %cst_54 : f32 to vector<1x16x128xf32>
    %282 = arith.select %27, %280, %281 : vector<1x16x128xi1>, vector<1x16x128xf32>
    %283 = arith.minimumf %267, %272 : vector<1x16x128xf32>
    %284 = arith.minimumf %277, %282 : vector<1x16x128xf32>
    %285 = arith.minimumf %283, %284 : vector<1x16x128xf32>
    %286 = arith.minimumf %285, %262 : vector<1x16x128xf32>
    %287 = vector.extract_strided_slice %286 {offsets = [0, 15, 0], sizes = [1, 1, 128], strides = [1, 1, 1]} : vector<1x16x128xf32> to vector<1x1x128xf32>
    %288 = vector.extract_strided_slice %286 {offsets = [0, 0, 0], sizes = [1, 15, 128], strides = [1, 1, 1]} : vector<1x16x128xf32> to vector<1x15x128xf32>
    %289 = tpu.concatenate %287, %288 in 1 : vector<1x1x128xf32>, vector<1x15x128xf32> -> vector<1x16x128xf32>
    %cst_55 = arith.constant 0xFF800000 : f32
    %290 = vector.broadcast %cst_55 : f32 to vector<1x16x128xf32>
    %291 = arith.select %21, %289, %290 : vector<1x16x128xi1>, vector<1x16x128xf32>
    %292 = vector.extract_strided_slice %286 {offsets = [0, 1, 0], sizes = [1, 15, 128], strides = [1, 1, 1]} : vector<1x16x128xf32> to vector<1x15x128xf32>
    %293 = vector.extract_strided_slice %286 {offsets = [0, 0, 0], sizes = [1, 1, 128], strides = [1, 1, 1]} : vector<1x16x128xf32> to vector<1x1x128xf32>
    %294 = tpu.concatenate %292, %293 in 1 : vector<1x15x128xf32>, vector<1x1x128xf32> -> vector<1x16x128xf32>
    %cst_56 = arith.constant 0xFF800000 : f32
    %295 = vector.broadcast %cst_56 : f32 to vector<1x16x128xf32>
    %296 = arith.select %23, %294, %295 : vector<1x16x128xi1>, vector<1x16x128xf32>
    %297 = arith.maximumf %291, %296 : vector<1x16x128xf32>
    %298 = arith.maximumf %297, %286 : vector<1x16x128xf32>
    %299 = vector.extract_strided_slice %298 {offsets = [0, 0, 127], sizes = [1, 16, 1], strides = [1, 1, 1]} : vector<1x16x128xf32> to vector<1x16x1xf32>
    %300 = vector.extract_strided_slice %298 {offsets = [0, 0, 0], sizes = [1, 16, 127], strides = [1, 1, 1]} : vector<1x16x128xf32> to vector<1x16x127xf32>
    %301 = tpu.concatenate %299, %300 in 2 : vector<1x16x1xf32>, vector<1x16x127xf32> -> vector<1x16x128xf32>
    %cst_57 = arith.constant 0xFF800000 : f32
    %302 = vector.broadcast %cst_57 : f32 to vector<1x16x128xf32>
    %303 = arith.select %25, %301, %302 : vector<1x16x128xi1>, vector<1x16x128xf32>
    %304 = vector.extract_strided_slice %298 {offsets = [0, 0, 1], sizes = [1, 16, 127], strides = [1, 1, 1]} : vector<1x16x128xf32> to vector<1x16x127xf32>
    %305 = vector.extract_strided_slice %298 {offsets = [0, 0, 0], sizes = [1, 16, 1], strides = [1, 1, 1]} : vector<1x16x128xf32> to vector<1x16x1xf32>
    %306 = tpu.concatenate %304, %305 in 2 : vector<1x16x127xf32>, vector<1x16x1xf32> -> vector<1x16x128xf32>
    %cst_58 = arith.constant 0xFF800000 : f32
    %307 = vector.broadcast %cst_58 : f32 to vector<1x16x128xf32>
    %308 = arith.select %27, %306, %307 : vector<1x16x128xi1>, vector<1x16x128xf32>
    %309 = arith.maximumf %303, %308 : vector<1x16x128xf32>
    %310 = arith.maximumf %309, %298 : vector<1x16x128xf32>
    %311 = arith.subf %262, %310 : vector<1x16x128xf32>
    %cst_59 = arith.constant 0.000000e+00 : f32
    %312 = vector.broadcast %cst_59 : f32 to vector<1x16x128xf32>
    %313 = arith.maximumf %311, %312 : vector<1x16x128xf32>
    %314 = arith.mulf %238, %313 : vector<1x16x128xf32>
    %315 = arith.subf %313, %314 : vector<1x16x128xf32>
    %cst_60 = arith.constant 0.000000e+00 : f32
    %316 = vector.broadcast %cst_60 : f32 to vector<1x16x128xf32>
    %317 = arith.maximumf %315, %316 : vector<1x16x128xf32>
    %318 = arith.addf %238, %317 : vector<1x16x128xf32>
    %319 = vector.extract_strided_slice %0 {offsets = [0, 15, 0], sizes = [1, 1, 128], strides = [1, 1, 1]} : vector<1x16x128xf32> to vector<1x1x128xf32>
    %320 = vector.extract_strided_slice %0 {offsets = [0, 0, 0], sizes = [1, 15, 128], strides = [1, 1, 1]} : vector<1x16x128xf32> to vector<1x15x128xf32>
    %321 = tpu.concatenate %319, %320 in 1 : vector<1x1x128xf32>, vector<1x15x128xf32> -> vector<1x16x128xf32>
    %cst_61 = arith.constant 0x7F800000 : f32
    %322 = vector.broadcast %cst_61 : f32 to vector<1x16x128xf32>
    %323 = arith.select %21, %321, %322 : vector<1x16x128xi1>, vector<1x16x128xf32>
    %324 = vector.extract_strided_slice %0 {offsets = [0, 1, 0], sizes = [1, 15, 128], strides = [1, 1, 1]} : vector<1x16x128xf32> to vector<1x15x128xf32>
    %325 = vector.extract_strided_slice %0 {offsets = [0, 0, 0], sizes = [1, 1, 128], strides = [1, 1, 1]} : vector<1x16x128xf32> to vector<1x1x128xf32>
    %326 = tpu.concatenate %324, %325 in 1 : vector<1x15x128xf32>, vector<1x1x128xf32> -> vector<1x16x128xf32>
    %cst_62 = arith.constant 0x7F800000 : f32
    %327 = vector.broadcast %cst_62 : f32 to vector<1x16x128xf32>
    %328 = arith.select %23, %326, %327 : vector<1x16x128xi1>, vector<1x16x128xf32>
    %329 = vector.extract_strided_slice %0 {offsets = [0, 0, 127], sizes = [1, 16, 1], strides = [1, 1, 1]} : vector<1x16x128xf32> to vector<1x16x1xf32>
    %330 = vector.extract_strided_slice %0 {offsets = [0, 0, 0], sizes = [1, 16, 127], strides = [1, 1, 1]} : vector<1x16x128xf32> to vector<1x16x127xf32>
    %331 = tpu.concatenate %329, %330 in 2 : vector<1x16x1xf32>, vector<1x16x127xf32> -> vector<1x16x128xf32>
    %cst_63 = arith.constant 0x7F800000 : f32
    %332 = vector.broadcast %cst_63 : f32 to vector<1x16x128xf32>
    %333 = arith.select %25, %331, %332 : vector<1x16x128xi1>, vector<1x16x128xf32>
    %334 = vector.extract_strided_slice %0 {offsets = [0, 0, 1], sizes = [1, 16, 127], strides = [1, 1, 1]} : vector<1x16x128xf32> to vector<1x16x127xf32>
    %335 = vector.extract_strided_slice %0 {offsets = [0, 0, 0], sizes = [1, 16, 1], strides = [1, 1, 1]} : vector<1x16x128xf32> to vector<1x16x1xf32>
    %336 = tpu.concatenate %334, %335 in 2 : vector<1x16x127xf32>, vector<1x16x1xf32> -> vector<1x16x128xf32>
    %cst_64 = arith.constant 0x7F800000 : f32
    %337 = vector.broadcast %cst_64 : f32 to vector<1x16x128xf32>
    %338 = arith.select %27, %336, %337 : vector<1x16x128xi1>, vector<1x16x128xf32>
    %339 = arith.minimumf %323, %328 : vector<1x16x128xf32>
    %340 = arith.minimumf %333, %338 : vector<1x16x128xf32>
    %341 = arith.minimumf %339, %340 : vector<1x16x128xf32>
    %342 = arith.minimumf %341, %0 : vector<1x16x128xf32>
    %343 = vector.extract_strided_slice %342 {offsets = [0, 15, 0], sizes = [1, 1, 128], strides = [1, 1, 1]} : vector<1x16x128xf32> to vector<1x1x128xf32>
    %344 = vector.extract_strided_slice %342 {offsets = [0, 0, 0], sizes = [1, 15, 128], strides = [1, 1, 1]} : vector<1x16x128xf32> to vector<1x15x128xf32>
    %345 = tpu.concatenate %343, %344 in 1 : vector<1x1x128xf32>, vector<1x15x128xf32> -> vector<1x16x128xf32>
    %cst_65 = arith.constant 0xFF800000 : f32
    %346 = vector.broadcast %cst_65 : f32 to vector<1x16x128xf32>
    %347 = arith.select %21, %345, %346 : vector<1x16x128xi1>, vector<1x16x128xf32>
    %348 = vector.extract_strided_slice %342 {offsets = [0, 1, 0], sizes = [1, 15, 128], strides = [1, 1, 1]} : vector<1x16x128xf32> to vector<1x15x128xf32>
    %349 = vector.extract_strided_slice %342 {offsets = [0, 0, 0], sizes = [1, 1, 128], strides = [1, 1, 1]} : vector<1x16x128xf32> to vector<1x1x128xf32>
    %350 = tpu.concatenate %348, %349 in 1 : vector<1x15x128xf32>, vector<1x1x128xf32> -> vector<1x16x128xf32>
    %cst_66 = arith.constant 0xFF800000 : f32
    %351 = vector.broadcast %cst_66 : f32 to vector<1x16x128xf32>
    %352 = arith.select %23, %350, %351 : vector<1x16x128xi1>, vector<1x16x128xf32>
    %353 = arith.maximumf %347, %352 : vector<1x16x128xf32>
    %354 = arith.maximumf %353, %342 : vector<1x16x128xf32>
    %355 = vector.extract_strided_slice %354 {offsets = [0, 0, 127], sizes = [1, 16, 1], strides = [1, 1, 1]} : vector<1x16x128xf32> to vector<1x16x1xf32>
    %356 = vector.extract_strided_slice %354 {offsets = [0, 0, 0], sizes = [1, 16, 127], strides = [1, 1, 1]} : vector<1x16x128xf32> to vector<1x16x127xf32>
    %357 = tpu.concatenate %355, %356 in 2 : vector<1x16x1xf32>, vector<1x16x127xf32> -> vector<1x16x128xf32>
    %cst_67 = arith.constant 0xFF800000 : f32
    %358 = vector.broadcast %cst_67 : f32 to vector<1x16x128xf32>
    %359 = arith.select %25, %357, %358 : vector<1x16x128xi1>, vector<1x16x128xf32>
    %360 = vector.extract_strided_slice %354 {offsets = [0, 0, 1], sizes = [1, 16, 127], strides = [1, 1, 1]} : vector<1x16x128xf32> to vector<1x16x127xf32>
    %361 = vector.extract_strided_slice %354 {offsets = [0, 0, 0], sizes = [1, 16, 1], strides = [1, 1, 1]} : vector<1x16x128xf32> to vector<1x16x1xf32>
    %362 = tpu.concatenate %360, %361 in 2 : vector<1x16x127xf32>, vector<1x16x1xf32> -> vector<1x16x128xf32>
    %cst_68 = arith.constant 0xFF800000 : f32
    %363 = vector.broadcast %cst_68 : f32 to vector<1x16x128xf32>
    %364 = arith.select %27, %362, %363 : vector<1x16x128xi1>, vector<1x16x128xf32>
    %365 = arith.maximumf %359, %364 : vector<1x16x128xf32>
    %366 = arith.maximumf %365, %354 : vector<1x16x128xf32>
    %367 = arith.subf %0, %366 : vector<1x16x128xf32>
    %cst_69 = arith.constant 0.000000e+00 : f32
    %368 = vector.broadcast %cst_69 : f32 to vector<1x16x128xf32>
    %369 = arith.maximumf %367, %368 : vector<1x16x128xf32>
    %370 = vector.extract_strided_slice %0 {offsets = [0, 15, 0], sizes = [1, 1, 128], strides = [1, 1, 1]} : vector<1x16x128xf32> to vector<1x1x128xf32>
    %371 = vector.extract_strided_slice %0 {offsets = [0, 0, 0], sizes = [1, 15, 128], strides = [1, 1, 1]} : vector<1x16x128xf32> to vector<1x15x128xf32>
    %372 = tpu.concatenate %370, %371 in 1 : vector<1x1x128xf32>, vector<1x15x128xf32> -> vector<1x16x128xf32>
    %cst_70 = arith.constant 0x7F800000 : f32
    %373 = vector.broadcast %cst_70 : f32 to vector<1x16x128xf32>
    %374 = arith.select %21, %372, %373 : vector<1x16x128xi1>, vector<1x16x128xf32>
    %375 = vector.extract_strided_slice %0 {offsets = [0, 1, 0], sizes = [1, 15, 128], strides = [1, 1, 1]} : vector<1x16x128xf32> to vector<1x15x128xf32>
    %376 = vector.extract_strided_slice %0 {offsets = [0, 0, 0], sizes = [1, 1, 128], strides = [1, 1, 1]} : vector<1x16x128xf32> to vector<1x1x128xf32>
    %377 = tpu.concatenate %375, %376 in 1 : vector<1x15x128xf32>, vector<1x1x128xf32> -> vector<1x16x128xf32>
    %cst_71 = arith.constant 0x7F800000 : f32
    %378 = vector.broadcast %cst_71 : f32 to vector<1x16x128xf32>
    %379 = arith.select %23, %377, %378 : vector<1x16x128xi1>, vector<1x16x128xf32>
    %380 = vector.extract_strided_slice %0 {offsets = [0, 0, 127], sizes = [1, 16, 1], strides = [1, 1, 1]} : vector<1x16x128xf32> to vector<1x16x1xf32>
    %381 = vector.extract_strided_slice %0 {offsets = [0, 0, 0], sizes = [1, 16, 127], strides = [1, 1, 1]} : vector<1x16x128xf32> to vector<1x16x127xf32>
    %382 = tpu.concatenate %380, %381 in 2 : vector<1x16x1xf32>, vector<1x16x127xf32> -> vector<1x16x128xf32>
    %cst_72 = arith.constant 0x7F800000 : f32
    %383 = vector.broadcast %cst_72 : f32 to vector<1x16x128xf32>
    %384 = arith.select %25, %382, %383 : vector<1x16x128xi1>, vector<1x16x128xf32>
    %385 = vector.extract_strided_slice %0 {offsets = [0, 0, 1], sizes = [1, 16, 127], strides = [1, 1, 1]} : vector<1x16x128xf32> to vector<1x16x127xf32>
    %386 = vector.extract_strided_slice %0 {offsets = [0, 0, 0], sizes = [1, 16, 1], strides = [1, 1, 1]} : vector<1x16x128xf32> to vector<1x16x1xf32>
    %387 = tpu.concatenate %385, %386 in 2 : vector<1x16x127xf32>, vector<1x16x1xf32> -> vector<1x16x128xf32>
    %cst_73 = arith.constant 0x7F800000 : f32
    %388 = vector.broadcast %cst_73 : f32 to vector<1x16x128xf32>
    %389 = arith.select %27, %387, %388 : vector<1x16x128xi1>, vector<1x16x128xf32>
    %390 = arith.minimumf %374, %379 : vector<1x16x128xf32>
    %391 = arith.minimumf %384, %389 : vector<1x16x128xf32>
    %392 = arith.minimumf %390, %391 : vector<1x16x128xf32>
    %393 = arith.minimumf %392, %0 : vector<1x16x128xf32>
    %394 = vector.extract_strided_slice %393 {offsets = [0, 15, 0], sizes = [1, 1, 128], strides = [1, 1, 1]} : vector<1x16x128xf32> to vector<1x1x128xf32>
    %395 = vector.extract_strided_slice %393 {offsets = [0, 0, 0], sizes = [1, 15, 128], strides = [1, 1, 1]} : vector<1x16x128xf32> to vector<1x15x128xf32>
    %396 = tpu.concatenate %394, %395 in 1 : vector<1x1x128xf32>, vector<1x15x128xf32> -> vector<1x16x128xf32>
    %cst_74 = arith.constant 0x7F800000 : f32
    %397 = vector.broadcast %cst_74 : f32 to vector<1x16x128xf32>
    %398 = arith.select %21, %396, %397 : vector<1x16x128xi1>, vector<1x16x128xf32>
    %399 = vector.extract_strided_slice %393 {offsets = [0, 1, 0], sizes = [1, 15, 128], strides = [1, 1, 1]} : vector<1x16x128xf32> to vector<1x15x128xf32>
    %400 = vector.extract_strided_slice %393 {offsets = [0, 0, 0], sizes = [1, 1, 128], strides = [1, 1, 1]} : vector<1x16x128xf32> to vector<1x1x128xf32>
    %401 = tpu.concatenate %399, %400 in 1 : vector<1x15x128xf32>, vector<1x1x128xf32> -> vector<1x16x128xf32>
    %cst_75 = arith.constant 0x7F800000 : f32
    %402 = vector.broadcast %cst_75 : f32 to vector<1x16x128xf32>
    %403 = arith.select %23, %401, %402 : vector<1x16x128xi1>, vector<1x16x128xf32>
    %404 = vector.extract_strided_slice %393 {offsets = [0, 0, 127], sizes = [1, 16, 1], strides = [1, 1, 1]} : vector<1x16x128xf32> to vector<1x16x1xf32>
    %405 = vector.extract_strided_slice %393 {offsets = [0, 0, 0], sizes = [1, 16, 127], strides = [1, 1, 1]} : vector<1x16x128xf32> to vector<1x16x127xf32>
    %406 = tpu.concatenate %404, %405 in 2 : vector<1x16x1xf32>, vector<1x16x127xf32> -> vector<1x16x128xf32>
    %cst_76 = arith.constant 0x7F800000 : f32
    %407 = vector.broadcast %cst_76 : f32 to vector<1x16x128xf32>
    %408 = arith.select %25, %406, %407 : vector<1x16x128xi1>, vector<1x16x128xf32>
    %409 = vector.extract_strided_slice %393 {offsets = [0, 0, 1], sizes = [1, 16, 127], strides = [1, 1, 1]} : vector<1x16x128xf32> to vector<1x16x127xf32>
    %410 = vector.extract_strided_slice %393 {offsets = [0, 0, 0], sizes = [1, 16, 1], strides = [1, 1, 1]} : vector<1x16x128xf32> to vector<1x16x1xf32>
    %411 = tpu.concatenate %409, %410 in 2 : vector<1x16x127xf32>, vector<1x16x1xf32> -> vector<1x16x128xf32>
    %cst_77 = arith.constant 0x7F800000 : f32
    %412 = vector.broadcast %cst_77 : f32 to vector<1x16x128xf32>
    %413 = arith.select %27, %411, %412 : vector<1x16x128xi1>, vector<1x16x128xf32>
    %414 = arith.minimumf %398, %403 : vector<1x16x128xf32>
    %415 = arith.minimumf %408, %413 : vector<1x16x128xf32>
    %416 = arith.minimumf %414, %415 : vector<1x16x128xf32>
    %417 = arith.minimumf %416, %393 : vector<1x16x128xf32>
    %418 = vector.extract_strided_slice %417 {offsets = [0, 15, 0], sizes = [1, 1, 128], strides = [1, 1, 1]} : vector<1x16x128xf32> to vector<1x1x128xf32>
    %419 = vector.extract_strided_slice %417 {offsets = [0, 0, 0], sizes = [1, 15, 128], strides = [1, 1, 1]} : vector<1x16x128xf32> to vector<1x15x128xf32>
    %420 = tpu.concatenate %418, %419 in 1 : vector<1x1x128xf32>, vector<1x15x128xf32> -> vector<1x16x128xf32>
    %cst_78 = arith.constant 0xFF800000 : f32
    %421 = vector.broadcast %cst_78 : f32 to vector<1x16x128xf32>
    %422 = arith.select %21, %420, %421 : vector<1x16x128xi1>, vector<1x16x128xf32>
    %423 = vector.extract_strided_slice %417 {offsets = [0, 1, 0], sizes = [1, 15, 128], strides = [1, 1, 1]} : vector<1x16x128xf32> to vector<1x15x128xf32>
    %424 = vector.extract_strided_slice %417 {offsets = [0, 0, 0], sizes = [1, 1, 128], strides = [1, 1, 1]} : vector<1x16x128xf32> to vector<1x1x128xf32>
    %425 = tpu.concatenate %423, %424 in 1 : vector<1x15x128xf32>, vector<1x1x128xf32> -> vector<1x16x128xf32>
    %cst_79 = arith.constant 0xFF800000 : f32
    %426 = vector.broadcast %cst_79 : f32 to vector<1x16x128xf32>
    %427 = arith.select %23, %425, %426 : vector<1x16x128xi1>, vector<1x16x128xf32>
    %428 = arith.maximumf %422, %427 : vector<1x16x128xf32>
    %429 = arith.maximumf %428, %417 : vector<1x16x128xf32>
    %430 = vector.extract_strided_slice %429 {offsets = [0, 0, 127], sizes = [1, 16, 1], strides = [1, 1, 1]} : vector<1x16x128xf32> to vector<1x16x1xf32>
    %431 = vector.extract_strided_slice %429 {offsets = [0, 0, 0], sizes = [1, 16, 127], strides = [1, 1, 1]} : vector<1x16x128xf32> to vector<1x16x127xf32>
    %432 = tpu.concatenate %430, %431 in 2 : vector<1x16x1xf32>, vector<1x16x127xf32> -> vector<1x16x128xf32>
    %cst_80 = arith.constant 0xFF800000 : f32
    %433 = vector.broadcast %cst_80 : f32 to vector<1x16x128xf32>
    %434 = arith.select %25, %432, %433 : vector<1x16x128xi1>, vector<1x16x128xf32>
    %435 = vector.extract_strided_slice %429 {offsets = [0, 0, 1], sizes = [1, 16, 127], strides = [1, 1, 1]} : vector<1x16x128xf32> to vector<1x16x127xf32>
    %436 = vector.extract_strided_slice %429 {offsets = [0, 0, 0], sizes = [1, 16, 1], strides = [1, 1, 1]} : vector<1x16x128xf32> to vector<1x16x1xf32>
    %437 = tpu.concatenate %435, %436 in 2 : vector<1x16x127xf32>, vector<1x16x1xf32> -> vector<1x16x128xf32>
    %cst_81 = arith.constant 0xFF800000 : f32
    %438 = vector.broadcast %cst_81 : f32 to vector<1x16x128xf32>
    %439 = arith.select %27, %437, %438 : vector<1x16x128xi1>, vector<1x16x128xf32>
    %440 = arith.maximumf %434, %439 : vector<1x16x128xf32>
    %441 = arith.maximumf %440, %429 : vector<1x16x128xf32>
    %442 = arith.subf %393, %441 : vector<1x16x128xf32>
    %cst_82 = arith.constant 0.000000e+00 : f32
    %443 = vector.broadcast %cst_82 : f32 to vector<1x16x128xf32>
    %444 = arith.maximumf %442, %443 : vector<1x16x128xf32>
    %445 = arith.mulf %369, %444 : vector<1x16x128xf32>
    %446 = arith.subf %444, %445 : vector<1x16x128xf32>
    %cst_83 = arith.constant 0.000000e+00 : f32
    %447 = vector.broadcast %cst_83 : f32 to vector<1x16x128xf32>
    %448 = arith.maximumf %446, %447 : vector<1x16x128xf32>
    %449 = arith.addf %369, %448 : vector<1x16x128xf32>
    %450 = vector.extract_strided_slice %393 {offsets = [0, 15, 0], sizes = [1, 1, 128], strides = [1, 1, 1]} : vector<1x16x128xf32> to vector<1x1x128xf32>
    %451 = vector.extract_strided_slice %393 {offsets = [0, 0, 0], sizes = [1, 15, 128], strides = [1, 1, 1]} : vector<1x16x128xf32> to vector<1x15x128xf32>
    %452 = tpu.concatenate %450, %451 in 1 : vector<1x1x128xf32>, vector<1x15x128xf32> -> vector<1x16x128xf32>
    %cst_84 = arith.constant 0x7F800000 : f32
    %453 = vector.broadcast %cst_84 : f32 to vector<1x16x128xf32>
    %454 = arith.select %21, %452, %453 : vector<1x16x128xi1>, vector<1x16x128xf32>
    %455 = vector.extract_strided_slice %393 {offsets = [0, 1, 0], sizes = [1, 15, 128], strides = [1, 1, 1]} : vector<1x16x128xf32> to vector<1x15x128xf32>
    %456 = vector.extract_strided_slice %393 {offsets = [0, 0, 0], sizes = [1, 1, 128], strides = [1, 1, 1]} : vector<1x16x128xf32> to vector<1x1x128xf32>
    %457 = tpu.concatenate %455, %456 in 1 : vector<1x15x128xf32>, vector<1x1x128xf32> -> vector<1x16x128xf32>
    %cst_85 = arith.constant 0x7F800000 : f32
    %458 = vector.broadcast %cst_85 : f32 to vector<1x16x128xf32>
    %459 = arith.select %23, %457, %458 : vector<1x16x128xi1>, vector<1x16x128xf32>
    %460 = vector.extract_strided_slice %393 {offsets = [0, 0, 127], sizes = [1, 16, 1], strides = [1, 1, 1]} : vector<1x16x128xf32> to vector<1x16x1xf32>
    %461 = vector.extract_strided_slice %393 {offsets = [0, 0, 0], sizes = [1, 16, 127], strides = [1, 1, 1]} : vector<1x16x128xf32> to vector<1x16x127xf32>
    %462 = tpu.concatenate %460, %461 in 2 : vector<1x16x1xf32>, vector<1x16x127xf32> -> vector<1x16x128xf32>
    %cst_86 = arith.constant 0x7F800000 : f32
    %463 = vector.broadcast %cst_86 : f32 to vector<1x16x128xf32>
    %464 = arith.select %25, %462, %463 : vector<1x16x128xi1>, vector<1x16x128xf32>
    %465 = vector.extract_strided_slice %393 {offsets = [0, 0, 1], sizes = [1, 16, 127], strides = [1, 1, 1]} : vector<1x16x128xf32> to vector<1x16x127xf32>
    %466 = vector.extract_strided_slice %393 {offsets = [0, 0, 0], sizes = [1, 16, 1], strides = [1, 1, 1]} : vector<1x16x128xf32> to vector<1x16x1xf32>
    %467 = tpu.concatenate %465, %466 in 2 : vector<1x16x127xf32>, vector<1x16x1xf32> -> vector<1x16x128xf32>
    %cst_87 = arith.constant 0x7F800000 : f32
    %468 = vector.broadcast %cst_87 : f32 to vector<1x16x128xf32>
    %469 = arith.select %27, %467, %468 : vector<1x16x128xi1>, vector<1x16x128xf32>
    %470 = arith.minimumf %454, %459 : vector<1x16x128xf32>
    %471 = arith.minimumf %464, %469 : vector<1x16x128xf32>
    %472 = arith.minimumf %470, %471 : vector<1x16x128xf32>
    %473 = arith.minimumf %472, %393 : vector<1x16x128xf32>
    %474 = vector.extract_strided_slice %473 {offsets = [0, 15, 0], sizes = [1, 1, 128], strides = [1, 1, 1]} : vector<1x16x128xf32> to vector<1x1x128xf32>
    %475 = vector.extract_strided_slice %473 {offsets = [0, 0, 0], sizes = [1, 15, 128], strides = [1, 1, 1]} : vector<1x16x128xf32> to vector<1x15x128xf32>
    %476 = tpu.concatenate %474, %475 in 1 : vector<1x1x128xf32>, vector<1x15x128xf32> -> vector<1x16x128xf32>
    %cst_88 = arith.constant 0x7F800000 : f32
    %477 = vector.broadcast %cst_88 : f32 to vector<1x16x128xf32>
    %478 = arith.select %21, %476, %477 : vector<1x16x128xi1>, vector<1x16x128xf32>
    %479 = vector.extract_strided_slice %473 {offsets = [0, 1, 0], sizes = [1, 15, 128], strides = [1, 1, 1]} : vector<1x16x128xf32> to vector<1x15x128xf32>
    %480 = vector.extract_strided_slice %473 {offsets = [0, 0, 0], sizes = [1, 1, 128], strides = [1, 1, 1]} : vector<1x16x128xf32> to vector<1x1x128xf32>
    %481 = tpu.concatenate %479, %480 in 1 : vector<1x15x128xf32>, vector<1x1x128xf32> -> vector<1x16x128xf32>
    %cst_89 = arith.constant 0x7F800000 : f32
    %482 = vector.broadcast %cst_89 : f32 to vector<1x16x128xf32>
    %483 = arith.select %23, %481, %482 : vector<1x16x128xi1>, vector<1x16x128xf32>
    %484 = vector.extract_strided_slice %473 {offsets = [0, 0, 127], sizes = [1, 16, 1], strides = [1, 1, 1]} : vector<1x16x128xf32> to vector<1x16x1xf32>
    %485 = vector.extract_strided_slice %473 {offsets = [0, 0, 0], sizes = [1, 16, 127], strides = [1, 1, 1]} : vector<1x16x128xf32> to vector<1x16x127xf32>
    %486 = tpu.concatenate %484, %485 in 2 : vector<1x16x1xf32>, vector<1x16x127xf32> -> vector<1x16x128xf32>
    %cst_90 = arith.constant 0x7F800000 : f32
    %487 = vector.broadcast %cst_90 : f32 to vector<1x16x128xf32>
    %488 = arith.select %25, %486, %487 : vector<1x16x128xi1>, vector<1x16x128xf32>
    %489 = vector.extract_strided_slice %473 {offsets = [0, 0, 1], sizes = [1, 16, 127], strides = [1, 1, 1]} : vector<1x16x128xf32> to vector<1x16x127xf32>
    %490 = vector.extract_strided_slice %473 {offsets = [0, 0, 0], sizes = [1, 16, 1], strides = [1, 1, 1]} : vector<1x16x128xf32> to vector<1x16x1xf32>
    %491 = tpu.concatenate %489, %490 in 2 : vector<1x16x127xf32>, vector<1x16x1xf32> -> vector<1x16x128xf32>
    %cst_91 = arith.constant 0x7F800000 : f32
    %492 = vector.broadcast %cst_91 : f32 to vector<1x16x128xf32>
    %493 = arith.select %27, %491, %492 : vector<1x16x128xi1>, vector<1x16x128xf32>
    %494 = arith.minimumf %478, %483 : vector<1x16x128xf32>
    %495 = arith.minimumf %488, %493 : vector<1x16x128xf32>
    %496 = arith.minimumf %494, %495 : vector<1x16x128xf32>
    %497 = arith.minimumf %496, %473 : vector<1x16x128xf32>
    %498 = vector.extract_strided_slice %497 {offsets = [0, 15, 0], sizes = [1, 1, 128], strides = [1, 1, 1]} : vector<1x16x128xf32> to vector<1x1x128xf32>
    %499 = vector.extract_strided_slice %497 {offsets = [0, 0, 0], sizes = [1, 15, 128], strides = [1, 1, 1]} : vector<1x16x128xf32> to vector<1x15x128xf32>
    %500 = tpu.concatenate %498, %499 in 1 : vector<1x1x128xf32>, vector<1x15x128xf32> -> vector<1x16x128xf32>
    %cst_92 = arith.constant 0xFF800000 : f32
    %501 = vector.broadcast %cst_92 : f32 to vector<1x16x128xf32>
    %502 = arith.select %21, %500, %501 : vector<1x16x128xi1>, vector<1x16x128xf32>
    %503 = vector.extract_strided_slice %497 {offsets = [0, 1, 0], sizes = [1, 15, 128], strides = [1, 1, 1]} : vector<1x16x128xf32> to vector<1x15x128xf32>
    %504 = vector.extract_strided_slice %497 {offsets = [0, 0, 0], sizes = [1, 1, 128], strides = [1, 1, 1]} : vector<1x16x128xf32> to vector<1x1x128xf32>
    %505 = tpu.concatenate %503, %504 in 1 : vector<1x15x128xf32>, vector<1x1x128xf32> -> vector<1x16x128xf32>
    %cst_93 = arith.constant 0xFF800000 : f32
    %506 = vector.broadcast %cst_93 : f32 to vector<1x16x128xf32>
    %507 = arith.select %23, %505, %506 : vector<1x16x128xi1>, vector<1x16x128xf32>
    %508 = arith.maximumf %502, %507 : vector<1x16x128xf32>
    %509 = arith.maximumf %508, %497 : vector<1x16x128xf32>
    %510 = vector.extract_strided_slice %509 {offsets = [0, 0, 127], sizes = [1, 16, 1], strides = [1, 1, 1]} : vector<1x16x128xf32> to vector<1x16x1xf32>
    %511 = vector.extract_strided_slice %509 {offsets = [0, 0, 0], sizes = [1, 16, 127], strides = [1, 1, 1]} : vector<1x16x128xf32> to vector<1x16x127xf32>
    %512 = tpu.concatenate %510, %511 in 2 : vector<1x16x1xf32>, vector<1x16x127xf32> -> vector<1x16x128xf32>
    %cst_94 = arith.constant 0xFF800000 : f32
    %513 = vector.broadcast %cst_94 : f32 to vector<1x16x128xf32>
    %514 = arith.select %25, %512, %513 : vector<1x16x128xi1>, vector<1x16x128xf32>
    %515 = vector.extract_strided_slice %509 {offsets = [0, 0, 1], sizes = [1, 16, 127], strides = [1, 1, 1]} : vector<1x16x128xf32> to vector<1x16x127xf32>
    %516 = vector.extract_strided_slice %509 {offsets = [0, 0, 0], sizes = [1, 16, 1], strides = [1, 1, 1]} : vector<1x16x128xf32> to vector<1x16x1xf32>
    %517 = tpu.concatenate %515, %516 in 2 : vector<1x16x127xf32>, vector<1x16x1xf32> -> vector<1x16x128xf32>
    %cst_95 = arith.constant 0xFF800000 : f32
    %518 = vector.broadcast %cst_95 : f32 to vector<1x16x128xf32>
    %519 = arith.select %27, %517, %518 : vector<1x16x128xi1>, vector<1x16x128xf32>
    %520 = arith.maximumf %514, %519 : vector<1x16x128xf32>
    %521 = arith.maximumf %520, %509 : vector<1x16x128xf32>
    %522 = arith.subf %473, %521 : vector<1x16x128xf32>
    %cst_96 = arith.constant 0.000000e+00 : f32
    %523 = vector.broadcast %cst_96 : f32 to vector<1x16x128xf32>
    %524 = arith.maximumf %522, %523 : vector<1x16x128xf32>
    %525 = arith.mulf %449, %524 : vector<1x16x128xf32>
    %526 = arith.subf %524, %525 : vector<1x16x128xf32>
    %cst_97 = arith.constant 0.000000e+00 : f32
    %527 = vector.broadcast %cst_97 : f32 to vector<1x16x128xf32>
    %528 = arith.maximumf %526, %527 : vector<1x16x128xf32>
    %529 = arith.addf %449, %528 : vector<1x16x128xf32>
    %530 = vector.extract_strided_slice %473 {offsets = [0, 15, 0], sizes = [1, 1, 128], strides = [1, 1, 1]} : vector<1x16x128xf32> to vector<1x1x128xf32>
    %531 = vector.extract_strided_slice %473 {offsets = [0, 0, 0], sizes = [1, 15, 128], strides = [1, 1, 1]} : vector<1x16x128xf32> to vector<1x15x128xf32>
    %532 = tpu.concatenate %530, %531 in 1 : vector<1x1x128xf32>, vector<1x15x128xf32> -> vector<1x16x128xf32>
    %cst_98 = arith.constant 0x7F800000 : f32
    %533 = vector.broadcast %cst_98 : f32 to vector<1x16x128xf32>
    %534 = arith.select %21, %532, %533 : vector<1x16x128xi1>, vector<1x16x128xf32>
    %535 = vector.extract_strided_slice %473 {offsets = [0, 1, 0], sizes = [1, 15, 128], strides = [1, 1, 1]} : vector<1x16x128xf32> to vector<1x15x128xf32>
    %536 = vector.extract_strided_slice %473 {offsets = [0, 0, 0], sizes = [1, 1, 128], strides = [1, 1, 1]} : vector<1x16x128xf32> to vector<1x1x128xf32>
    %537 = tpu.concatenate %535, %536 in 1 : vector<1x15x128xf32>, vector<1x1x128xf32> -> vector<1x16x128xf32>
    %cst_99 = arith.constant 0x7F800000 : f32
    %538 = vector.broadcast %cst_99 : f32 to vector<1x16x128xf32>
    %539 = arith.select %23, %537, %538 : vector<1x16x128xi1>, vector<1x16x128xf32>
    %540 = vector.extract_strided_slice %473 {offsets = [0, 0, 127], sizes = [1, 16, 1], strides = [1, 1, 1]} : vector<1x16x128xf32> to vector<1x16x1xf32>
    %541 = vector.extract_strided_slice %473 {offsets = [0, 0, 0], sizes = [1, 16, 127], strides = [1, 1, 1]} : vector<1x16x128xf32> to vector<1x16x127xf32>
    %542 = tpu.concatenate %540, %541 in 2 : vector<1x16x1xf32>, vector<1x16x127xf32> -> vector<1x16x128xf32>
    %cst_100 = arith.constant 0x7F800000 : f32
    %543 = vector.broadcast %cst_100 : f32 to vector<1x16x128xf32>
    %544 = arith.select %25, %542, %543 : vector<1x16x128xi1>, vector<1x16x128xf32>
    %545 = vector.extract_strided_slice %473 {offsets = [0, 0, 1], sizes = [1, 16, 127], strides = [1, 1, 1]} : vector<1x16x128xf32> to vector<1x16x127xf32>
    %546 = vector.extract_strided_slice %473 {offsets = [0, 0, 0], sizes = [1, 16, 1], strides = [1, 1, 1]} : vector<1x16x128xf32> to vector<1x16x1xf32>
    %547 = tpu.concatenate %545, %546 in 2 : vector<1x16x127xf32>, vector<1x16x1xf32> -> vector<1x16x128xf32>
    %cst_101 = arith.constant 0x7F800000 : f32
    %548 = vector.broadcast %cst_101 : f32 to vector<1x16x128xf32>
    %549 = arith.select %27, %547, %548 : vector<1x16x128xi1>, vector<1x16x128xf32>
    %550 = arith.minimumf %534, %539 : vector<1x16x128xf32>
    %551 = arith.minimumf %544, %549 : vector<1x16x128xf32>
    %552 = arith.minimumf %550, %551 : vector<1x16x128xf32>
    %553 = arith.minimumf %552, %473 : vector<1x16x128xf32>
    %554 = vector.extract_strided_slice %553 {offsets = [0, 15, 0], sizes = [1, 1, 128], strides = [1, 1, 1]} : vector<1x16x128xf32> to vector<1x1x128xf32>
    %555 = vector.extract_strided_slice %553 {offsets = [0, 0, 0], sizes = [1, 15, 128], strides = [1, 1, 1]} : vector<1x16x128xf32> to vector<1x15x128xf32>
    %556 = tpu.concatenate %554, %555 in 1 : vector<1x1x128xf32>, vector<1x15x128xf32> -> vector<1x16x128xf32>
    %cst_102 = arith.constant 0x7F800000 : f32
    %557 = vector.broadcast %cst_102 : f32 to vector<1x16x128xf32>
    %558 = arith.select %21, %556, %557 : vector<1x16x128xi1>, vector<1x16x128xf32>
    %559 = vector.extract_strided_slice %553 {offsets = [0, 1, 0], sizes = [1, 15, 128], strides = [1, 1, 1]} : vector<1x16x128xf32> to vector<1x15x128xf32>
    %560 = vector.extract_strided_slice %553 {offsets = [0, 0, 0], sizes = [1, 1, 128], strides = [1, 1, 1]} : vector<1x16x128xf32> to vector<1x1x128xf32>
    %561 = tpu.concatenate %559, %560 in 1 : vector<1x15x128xf32>, vector<1x1x128xf32> -> vector<1x16x128xf32>
    %cst_103 = arith.constant 0x7F800000 : f32
    %562 = vector.broadcast %cst_103 : f32 to vector<1x16x128xf32>
    %563 = arith.select %23, %561, %562 : vector<1x16x128xi1>, vector<1x16x128xf32>
    %564 = vector.extract_strided_slice %553 {offsets = [0, 0, 127], sizes = [1, 16, 1], strides = [1, 1, 1]} : vector<1x16x128xf32> to vector<1x16x1xf32>
    %565 = vector.extract_strided_slice %553 {offsets = [0, 0, 0], sizes = [1, 16, 127], strides = [1, 1, 1]} : vector<1x16x128xf32> to vector<1x16x127xf32>
    %566 = tpu.concatenate %564, %565 in 2 : vector<1x16x1xf32>, vector<1x16x127xf32> -> vector<1x16x128xf32>
    %cst_104 = arith.constant 0x7F800000 : f32
    %567 = vector.broadcast %cst_104 : f32 to vector<1x16x128xf32>
    %568 = arith.select %25, %566, %567 : vector<1x16x128xi1>, vector<1x16x128xf32>
    %569 = vector.extract_strided_slice %553 {offsets = [0, 0, 1], sizes = [1, 16, 127], strides = [1, 1, 1]} : vector<1x16x128xf32> to vector<1x16x127xf32>
    %570 = vector.extract_strided_slice %553 {offsets = [0, 0, 0], sizes = [1, 16, 1], strides = [1, 1, 1]} : vector<1x16x128xf32> to vector<1x16x1xf32>
    %571 = tpu.concatenate %569, %570 in 2 : vector<1x16x127xf32>, vector<1x16x1xf32> -> vector<1x16x128xf32>
    %cst_105 = arith.constant 0x7F800000 : f32
    %572 = vector.broadcast %cst_105 : f32 to vector<1x16x128xf32>
    %573 = arith.select %27, %571, %572 : vector<1x16x128xi1>, vector<1x16x128xf32>
    %574 = arith.minimumf %558, %563 : vector<1x16x128xf32>
    %575 = arith.minimumf %568, %573 : vector<1x16x128xf32>
    %576 = arith.minimumf %574, %575 : vector<1x16x128xf32>
    %577 = arith.minimumf %576, %553 : vector<1x16x128xf32>
    %578 = vector.extract_strided_slice %577 {offsets = [0, 15, 0], sizes = [1, 1, 128], strides = [1, 1, 1]} : vector<1x16x128xf32> to vector<1x1x128xf32>
    %579 = vector.extract_strided_slice %577 {offsets = [0, 0, 0], sizes = [1, 15, 128], strides = [1, 1, 1]} : vector<1x16x128xf32> to vector<1x15x128xf32>
    %580 = tpu.concatenate %578, %579 in 1 : vector<1x1x128xf32>, vector<1x15x128xf32> -> vector<1x16x128xf32>
    %cst_106 = arith.constant 0xFF800000 : f32
    %581 = vector.broadcast %cst_106 : f32 to vector<1x16x128xf32>
    %582 = arith.select %21, %580, %581 : vector<1x16x128xi1>, vector<1x16x128xf32>
    %583 = vector.extract_strided_slice %577 {offsets = [0, 1, 0], sizes = [1, 15, 128], strides = [1, 1, 1]} : vector<1x16x128xf32> to vector<1x15x128xf32>
    %584 = vector.extract_strided_slice %577 {offsets = [0, 0, 0], sizes = [1, 1, 128], strides = [1, 1, 1]} : vector<1x16x128xf32> to vector<1x1x128xf32>
    %585 = tpu.concatenate %583, %584 in 1 : vector<1x15x128xf32>, vector<1x1x128xf32> -> vector<1x16x128xf32>
    %cst_107 = arith.constant 0xFF800000 : f32
    %586 = vector.broadcast %cst_107 : f32 to vector<1x16x128xf32>
    %587 = arith.select %23, %585, %586 : vector<1x16x128xi1>, vector<1x16x128xf32>
    %588 = arith.maximumf %582, %587 : vector<1x16x128xf32>
    %589 = arith.maximumf %588, %577 : vector<1x16x128xf32>
    %590 = vector.extract_strided_slice %589 {offsets = [0, 0, 127], sizes = [1, 16, 1], strides = [1, 1, 1]} : vector<1x16x128xf32> to vector<1x16x1xf32>
    %591 = vector.extract_strided_slice %589 {offsets = [0, 0, 0], sizes = [1, 16, 127], strides = [1, 1, 1]} : vector<1x16x128xf32> to vector<1x16x127xf32>
    %592 = tpu.concatenate %590, %591 in 2 : vector<1x16x1xf32>, vector<1x16x127xf32> -> vector<1x16x128xf32>
    %cst_108 = arith.constant 0xFF800000 : f32
    %593 = vector.broadcast %cst_108 : f32 to vector<1x16x128xf32>
    %594 = arith.select %25, %592, %593 : vector<1x16x128xi1>, vector<1x16x128xf32>
    %595 = vector.extract_strided_slice %589 {offsets = [0, 0, 1], sizes = [1, 16, 127], strides = [1, 1, 1]} : vector<1x16x128xf32> to vector<1x16x127xf32>
    %596 = vector.extract_strided_slice %589 {offsets = [0, 0, 0], sizes = [1, 16, 1], strides = [1, 1, 1]} : vector<1x16x128xf32> to vector<1x16x1xf32>
    %597 = tpu.concatenate %595, %596 in 2 : vector<1x16x127xf32>, vector<1x16x1xf32> -> vector<1x16x128xf32>
    %cst_109 = arith.constant 0xFF800000 : f32
    %598 = vector.broadcast %cst_109 : f32 to vector<1x16x128xf32>
    %599 = arith.select %27, %597, %598 : vector<1x16x128xi1>, vector<1x16x128xf32>
    %600 = arith.maximumf %594, %599 : vector<1x16x128xf32>
    %601 = arith.maximumf %600, %589 : vector<1x16x128xf32>
    %602 = arith.subf %553, %601 : vector<1x16x128xf32>
    %cst_110 = arith.constant 0.000000e+00 : f32
    %603 = vector.broadcast %cst_110 : f32 to vector<1x16x128xf32>
    %604 = arith.maximumf %602, %603 : vector<1x16x128xf32>
    %605 = arith.mulf %529, %604 : vector<1x16x128xf32>
    %606 = arith.subf %604, %605 : vector<1x16x128xf32>
    %cst_111 = arith.constant 0.000000e+00 : f32
    %607 = vector.broadcast %cst_111 : f32 to vector<1x16x128xf32>
    %608 = arith.maximumf %606, %607 : vector<1x16x128xf32>
    %609 = arith.addf %529, %608 : vector<1x16x128xf32>
    %610 = arith.mulf %0, %1 : vector<1x16x128xf32>
    %cst_112 = arith.constant dense<0.000000e+00> : vector<16x128xf32>
    %611 = vector.multi_reduction <add>, %610, %cst_112 [0] : vector<1x16x128xf32> to vector<16x128xf32>
    %cst_113 = arith.constant dense<0.000000e+00> : vector<128xf32>
    %612 = vector.multi_reduction <add>, %611, %cst_113 [0] : vector<16x128xf32> to vector<128xf32>
    %613 = vector.shape_cast %612 : vector<128xf32> to vector<1x128xf32>
    %cst_114 = arith.constant dense<0.000000e+00> : vector<16x128xf32>
    %614 = vector.multi_reduction <add>, %0, %cst_114 [0] : vector<1x16x128xf32> to vector<16x128xf32>
    %cst_115 = arith.constant dense<0.000000e+00> : vector<128xf32>
    %615 = vector.multi_reduction <add>, %614, %cst_115 [0] : vector<16x128xf32> to vector<128xf32>
    %616 = vector.shape_cast %615 : vector<128xf32> to vector<1x128xf32>
    %cst_116 = arith.constant dense<0.000000e+00> : vector<16x128xf32>
    %617 = vector.multi_reduction <add>, %1, %cst_116 [0] : vector<1x16x128xf32> to vector<16x128xf32>
    %cst_117 = arith.constant dense<0.000000e+00> : vector<128xf32>
    %618 = vector.multi_reduction <add>, %617, %cst_117 [0] : vector<16x128xf32> to vector<128xf32>
    %619 = vector.shape_cast %618 : vector<128xf32> to vector<1x128xf32>
    %620 = arith.mulf %318, %0 : vector<1x16x128xf32>
    %cst_118 = arith.constant dense<0.000000e+00> : vector<16x128xf32>
    %621 = vector.multi_reduction <add>, %620, %cst_118 [0] : vector<1x16x128xf32> to vector<16x128xf32>
    %cst_119 = arith.constant dense<0.000000e+00> : vector<128xf32>
    %622 = vector.multi_reduction <add>, %621, %cst_119 [0] : vector<16x128xf32> to vector<128xf32>
    %623 = vector.shape_cast %622 : vector<128xf32> to vector<1x128xf32>
    %cst_120 = arith.constant dense<0.000000e+00> : vector<16x128xf32>
    %624 = vector.multi_reduction <add>, %318, %cst_120 [0] : vector<1x16x128xf32> to vector<16x128xf32>
    %cst_121 = arith.constant dense<0.000000e+00> : vector<128xf32>
    %625 = vector.multi_reduction <add>, %624, %cst_121 [0] : vector<16x128xf32> to vector<128xf32>
    %626 = vector.shape_cast %625 : vector<128xf32> to vector<1x128xf32>
    %627 = arith.mulf %609, %1 : vector<1x16x128xf32>
    %cst_122 = arith.constant dense<0.000000e+00> : vector<16x128xf32>
    %628 = vector.multi_reduction <add>, %627, %cst_122 [0] : vector<1x16x128xf32> to vector<16x128xf32>
    %cst_123 = arith.constant dense<0.000000e+00> : vector<128xf32>
    %629 = vector.multi_reduction <add>, %628, %cst_123 [0] : vector<16x128xf32> to vector<128xf32>
    %630 = vector.shape_cast %629 : vector<128xf32> to vector<1x128xf32>
    %cst_124 = arith.constant dense<0.000000e+00> : vector<16x128xf32>
    %631 = vector.multi_reduction <add>, %609, %cst_124 [0] : vector<1x16x128xf32> to vector<16x128xf32>
    %cst_125 = arith.constant dense<0.000000e+00> : vector<128xf32>
    %632 = vector.multi_reduction <add>, %631, %cst_125 [0] : vector<16x128xf32> to vector<128xf32>
    %633 = vector.shape_cast %632 : vector<128xf32> to vector<1x128xf32>
    %cst_126 = arith.constant 0.000000e+00 : f32
    %634 = vector.broadcast %cst_126 : f32 to vector<1x128xf32>
    %635 = tpu.concatenate %613, %616, %619, %623, %626, %630, %633, %634 in 0 : vector<1x128xf32>, vector<1x128xf32>, vector<1x128xf32>, vector<1x128xf32>, vector<1x128xf32>, vector<1x128xf32>, vector<1x128xf32>, vector<1x128xf32> -> vector<8x128xf32>
    %636 = vector.shape_cast %635 : vector<8x128xf32> to vector<1x8x128xf32>
    %c0_127 = arith.constant 0 : index
    %c0_128 = arith.constant 0 : index
    %c0_129 = arith.constant 0 : index
    %637 = vector.load %arg3[%c0_127, %c0_128, %c0_129] : memref<1x8x128xf32, #tpu.memory_space<vmem>>, vector<1x8x128xf32>
    tpu.vector_store %arg3[%c0_127, %c0_128, %c0_129], %636 {strides = array<i32>} : memref<1x8x128xf32, #tpu.memory_space<vmem>>, vector<1x8x128xf32>,
    return
  }
  func.func @transform_0(%arg0: i32) -> (i32, i32, i32) {
    %c0_i32 = arith.constant 0 : i32
    %c0_i32_0 = arith.constant 0 : i32
    %c0_i32_1 = arith.constant 0 : i32
    return %arg0, %c0_i32, %c0_i32_0 : i32, i32, i32
  }
  func.func @transform_1(%arg0: i32) -> (i32, i32, i32) {
    %c0_i32 = arith.constant 0 : i32
    %c0_i32_0 = arith.constant 0 : i32
    %c0_i32_1 = arith.constant 0 : i32
    return %arg0, %c0_i32, %c0_i32_0 : i32, i32, i32
  }
  func.func @transform_2(%arg0: i32) -> (i32, i32, i32) {
    %c0_i32 = arith.constant 0 : i32
    %c0_i32_0 = arith.constant 0 : i32
    %c0_i32_1 = arith.constant 0 : i32
    return %arg0, %c0_i32, %c0_i32_0 : i32, i32, i32
  }
}

</mosaic_0001>

<llo_original>
// kernel: soft_dice_cldice.1
$region0: #{soft_dice_cldice.1}
  #allocation0 [shape = 'u32[]', space=smem, size = 0x4, offset = 0x4, fixed_abs, tag = 'smem constant byte address 0x4 - core index']
  #allocation1 [shape = 'u32[72,128]{1,0:T(1,128)}', space=vmem, size = 0x9000, scoped, tag = 'internal scratch']
  %s0 = inlined_call_operand.vmem [shape: f32[1,16,128], index: 0, kind: input, shape index: {}]
  %s1 = inlined_call_operand.vmem [shape: f32[1,16,128], index: 1, kind: input, shape index: {}]
  %s2 = inlined_call_operand.vmem [shape: f32[1,8,128], index: 2, kind: output, shape index: {}]
  %s3 = sld [smem:[#allocation0]]
  $region18: #{soft_dice_cldice.1} parent=0
    _
  %s5 = ssub.s32 1, %s3
  %s6 = scalar_select 0, %s5, %s3
  // Predicated region
  $region2: #{soft_dice_cldice.1} parent=0 // pred_check
    _
  $region3: #{soft_dice_cldice.1} parent=0 // pred_check_branch
    %8 = sbr.rel (0) target = $region5
  $region4: #{soft_dice_cldice.1} parent=0 // pred_region
    _
  $region5: #{soft_dice_cldice.1} parent=0 // pred_fallthru
    _
  // Predicated region
  $region6: #{soft_dice_cldice.1} parent=0 // pred_check
    _
  $region7: #{soft_dice_cldice.1} parent=0 // pred_check_branch
    %10 = sbr.rel (0) target = $region9
  $region8: #{soft_dice_cldice.1} parent=0 // pred_region
    _
  $region9: #{soft_dice_cldice.1} parent=0 // pred_fallthru
    _
  %v11 = vld [vmem:[%s0] sm:$0xff]
  %v12 = vld [vmem:[%s0 + $0x8] sm:$0xff]
  %v13 = vld [vmem:[%s1] sm:$0xff]
  %v14 = vld [vmem:[%s1 + $0x8] sm:$0xff]
  %v15 = vlaneseq
  %v16 = vshrl.u32 %v15, 7
  %v17 = vadd.s32 %v16, 8
  %v18 = vlaneseq
  %v19 = vand.u32 %v18, 127
  %vm20 = vcmp.lt.s32.totalorder %v19, 0
  %v21 = vsub.s32 0, %v19
  %v22 = vsel %vm20, %v21, %v19
  %v23 = vshrl.u32 %v22, 4
  %v24 = vand.u32 %v22, 15
  %v25 = vsub.s32 0, %v24
  %v26 = vsel %vm20, %v25, %v24
  %vm27 = vcmp.ne.s32.totalorder %v26, 0
  %vm28 = vcmp.lt.s32.totalorder %v26, 0
  %vm29 = vmand %vm28, %vm27
  %v30 = vadd.s32 %v26, 16
  %v31 = vsel %vm29, %v30, %v26
  %vm32 = vcmp.ge.s32.totalorder %v16, 1
  %vm33 = vcmp.ge.s32.totalorder %v17, 1
  %vm34 = vcmp.le.s32.totalorder %v16, 14
  %vm35 = vcmp.le.s32.totalorder %v17, 14
  %vm36 = vcmp.ge.s32.totalorder %v31, 1
  %vm37 = vcmp.le.s32.totalorder %v31, 14
  %v39 = vrot.slane %v14, 7
  %vm42 = vcmask 1040384
  %v43 = vrot.slane %v13, 7
  %v44 = vsel %vm42, %v43, %v39
  %v47 = vsel %vm42, %v39, %v43
  %v48 = vsel %vm32, %v47, inf
  %v49 = vsel %vm33, %v44, inf
  %vm50 = vcmask 1046528
  %v51 = vrot.slane %v13, 1
  %v52 = vrot.slane %v14, 1
  %v53 = vsel %vm50, %v51, %v52
  %v57 = vsel %vm50, %v52, %v51
  %v58 = vsel %vm34, %v53, inf
  %v59 = vsel %vm35, %v57, inf
  %60 = vrot.lane.b32.xlu0 %v13, 1
  %v61 = vpop.permute.xlu0 %60
  %62 = vrot.lane.b32.xlu0 %v14, 1
  %v63 = vpop.permute.xlu0 %62
  %v66 = vsel %vm36, %v61, inf
  %v67 = vsel %vm36, %v63, inf
  %68 = vrot.lane.b32.xlu0 %v13, 127
  %v69 = vpop.permute.xlu0 %68
  %70 = vrot.lane.b32.xlu0 %v14, 127
  %v71 = vpop.permute.xlu0 %70
  %v74 = vsel %vm37, %v69, inf
  %v75 = vsel %vm37, %v71, inf
  %v76 = vmin.f32 %v48, %v58
  %v77 = vmin.f32 %v49, %v59
  %v78 = vmin.f32 %v66, %v74
  %v79 = vmin.f32 %v67, %v75
  %v80 = vmin.f32 %v76, %v78
  %v81 = vmin.f32 %v77, %v79
  %v82 = vmin.f32 %v80, %v13
  %v83 = vmin.f32 %v81, %v14
  %v85 = vrot.slane %v83, 7
  %v88 = vrot.slane %v82, 7
  %v89 = vsel %vm42, %v88, %v85
  %v92 = vsel %vm42, %v85, %v88
  %v93 = vsel %vm32, %v92, -inf
  %v94 = vsel %vm33, %v89, -inf
  %v95 = vrot.slane %v82, 1
  %v96 = vrot.slane %v83, 1
  %v97 = vsel %vm50, %v95, %v96
  %v101 = vsel %vm50, %v96, %v95
  %v102 = vsel %vm34, %v97, -inf
  %v103 = vsel %vm35, %v101, -inf
  %v104 = vmax.f32 %v93, %v102
  %v105 = vmax.f32 %v94, %v103
  %v106 = vmax.f32 %v104, %v82
  %v107 = vmax.f32 %v105, %v83
  %110 = vrot.lane.b32.xlu0 %v106, 1
  %v111 = vpop.permute.xlu0 %110
  %112 = vrot.lane.b32.xlu0 %v107, 1
  %v113 = vpop.permute.xlu0 %112
  %v116 = vsel %vm36, %v111, -inf
  %v117 = vsel %vm36, %v113, -inf
  %118 = vrot.lane.b32.xlu0 %v106, 127
  %v119 = vpop.permute.xlu0 %118
  %120 = vrot.lane.b32.xlu0 %v107, 127
  %v121 = vpop.permute.xlu0 %120
  %v124 = vsel %vm37, %v119, -inf
  %v125 = vsel %vm37, %v121, -inf
  %v126 = vmax.f32 %v116, %v124
  %v127 = vmax.f32 %v117, %v125
  %v128 = vmax.f32 %v126, %v106
  %v129 = vmax.f32 %v127, %v107
  %v130 = vsub.f32 %v13, %v128
  %v131 = vsub.f32 %v14, %v129
  %v132 = vmax.f32 %v130, 0.0
  %v133 = vmax.f32 %v131, 0.0
  %v134 = vsel %vm32, %v92, inf
  %v135 = vsel %vm33, %v89, inf
  %v136 = vsel %vm34, %v97, inf
  %v137 = vsel %vm35, %v101, inf
  %138 = vrot.lane.b32.xlu0 %v82, 1
  %v139 = vpop.permute.xlu0 %138
  %140 = vrot.lane.b32.xlu0 %v83, 1
  %v141 = vpop.permute.xlu0 %140
  %v144 = vsel %vm36, %v139, inf
  %v145 = vsel %vm36, %v141, inf
  %146 = vrot.lane.b32.xlu0 %v82, 127
  %v147 = vpop.permute.xlu0 %146
  %148 = vrot.lane.b32.xlu0 %v83, 127
  %v149 = vpop.permute.xlu0 %148
  %v152 = vsel %vm37, %v147, inf
  %v153 = vsel %vm37, %v149, inf
  %v154 = vmin.f32 %v134, %v136
  %v155 = vmin.f32 %v135, %v137
  %v156 = vmin.f32 %v144, %v152
  %v157 = vmin.f32 %v145, %v153
  %v158 = vmin.f32 %v154, %v156
  %v159 = vmin.f32 %v155, %v157
  %v160 = vmin.f32 %v158, %v82
  %v161 = vmin.f32 %v159, %v83
  %v163 = vrot.slane %v161, 7
  %v166 = vrot.slane %v160, 7
  %v167 = vsel %vm42, %v166, %v163
  %v170 = vsel %vm42, %v163, %v166
  %v171 = vsel %vm32, %v170, -inf
  %v172 = vsel %vm33, %v167, -inf
  %v173 = vrot.slane %v160, 1
  %v174 = vrot.slane %v161, 1
  %v175 = vsel %vm50, %v173, %v174
  %v179 = vsel %vm50, %v174, %v173
  %v180 = vsel %vm34, %v175, -inf
  %v181 = vsel %vm35, %v179, -inf
  %v182 = vmax.f32 %v171, %v180
  %v183 = vmax.f32 %v172, %v181
  %v184 = vmax.f32 %v182, %v160
  %v185 = vmax.f32 %v183, %v161
  %188 = vrot.lane.b32.xlu0 %v184, 1
  %v189 = vpop.permute.xlu0 %188
  %190 = vrot.lane.b32.xlu0 %v185, 1
  %v191 = vpop.permute.xlu0 %190
  %v194 = vsel %vm36, %v189, -inf
  %v195 = vsel %vm36, %v191, -inf
  %196 = vrot.lane.b32.xlu0 %v184, 127
  %v197 = vpop.permute.xlu0 %196
  %198 = vrot.lane.b32.xlu0 %v185, 127
  %v199 = vpop.permute.xlu0 %198
  %v202 = vsel %vm37, %v197, -inf
  %v203 = vsel %vm37, %v199, -inf
  %v204 = vmax.f32 %v194, %v202
  %v205 = vmax.f32 %v195, %v203
  %v206 = vmax.f32 %v204, %v184
  %v207 = vmax.f32 %v205, %v185
  %v208 = vsub.f32 %v82, %v206
  %v209 = vsub.f32 %v83, %v207
  %v210 = vmax.f32 %v208, 0.0
  %v211 = vmax.f32 %v209, 0.0
  %v212 = vmul.f32 %v132, %v210
  %v213 = vmul.f32 %v133, %v211
  %v214 = vsub.f32 %v210, %v212
  %v215 = vsub.f32 %v211, %v213
  %v216 = vmax.f32 %v214, 0.0
  %v217 = vmax.f32 %v215, 0.0
  %v218 = vadd.f32 %v132, %v216
  %v219 = vadd.f32 %v133, %v217
  %v220 = vsel %vm32, %v170, inf
  %v221 = vsel %vm33, %v167, inf
  %v222 = vsel %vm34, %v175, inf
  %v223 = vsel %vm35, %v179, inf
  %224 = vrot.lane.b32.xlu0 %v160, 1
  %v225 = vpop.permute.xlu0 %224
  %226 = vrot.lane.b32.xlu0 %v161, 1
  %v227 = vpop.permute.xlu0 %226
  %v230 = vsel %vm36, %v225, inf
  %v231 = vsel %vm36, %v227, inf
  %232 = vrot.lane.b32.xlu0 %v160, 127
  %v233 = vpop.permute.xlu0 %232
  %234 = vrot.lane.b32.xlu0 %v161, 127
  %v235 = vpop.permute.xlu0 %234
  %v238 = vsel %vm37, %v233, inf
  %v239 = vsel %vm37, %v235, inf
  %v240 = vmin.f32 %v220, %v222
  %v241 = vmin.f32 %v221, %v223
  %v242 = vmin.f32 %v230, %v238
  %v243 = vmin.f32 %v231, %v239
  %v244 = vmin.f32 %v240, %v242
  %v245 = vmin.f32 %v241, %v243
  %v246 = vmin.f32 %v244, %v160
  %v247 = vmin.f32 %v245, %v161
  %v249 = vrot.slane %v247, 7
  %v252 = vrot.slane %v246, 7
  %v253 = vsel %vm42, %v252, %v249
  %v256 = vsel %vm42, %v249, %v252
  %v257 = vsel %vm32, %v256, -inf
  %v258 = vsel %vm33, %v253, -inf
  %v259 = vrot.slane %v246, 1
  %v260 = vrot.slane %v247, 1
  %v261 = vsel %vm50, %v259, %v260
  %v265 = vsel %vm50, %v260, %v259
  %v266 = vsel %vm34, %v261, -inf
  %v267 = vsel %vm35, %v265, -inf
  %v268 = vmax.f32 %v257, %v266
  %v269 = vmax.f32 %v258, %v267
  %v270 = vmax.f32 %v268, %v246
  %v271 = vmax.f32 %v269, %v247
  %274 = vrot.lane.b32.xlu0 %v270, 1
  %v275 = vpop.permute.xlu0 %274
  %276 = vrot.lane.b32.xlu0 %v271, 1
  %v277 = vpop.permute.xlu0 %276
  %v280 = vsel %vm36, %v275, -inf
  %v281 = vsel %vm36, %v277, -inf
  %282 = vrot.lane.b32.xlu0 %v270, 127
  %v283 = vpop.permute.xlu0 %282
  %284 = vrot.lane.b32.xlu0 %v271, 127
  %v285 = vpop.permute.xlu0 %284
  %v288 = vsel %vm37, %v283, -inf
  %v289 = vsel %vm37, %v285, -inf
  %v290 = vmax.f32 %v280, %v288
  %v291 = vmax.f32 %v281, %v289
  %v292 = vmax.f32 %v290, %v270
  %v293 = vmax.f32 %v291, %v271
  %v294 = vsub.f32 %v160, %v292
  %v295 = vsub.f32 %v161, %v293
  %v296 = vmax.f32 %v294, 0.0
  %v297 = vmax.f32 %v295, 0.0
  %v298 = vmul.f32 %v218, %v296
  %v299 = vmul.f32 %v219, %v297
  %v300 = vsub.f32 %v296, %v298
  %v301 = vsub.f32 %v297, %v299
  %v302 = vmax.f32 %v300, 0.0
  %v303 = vmax.f32 %v301, 0.0
  %v304 = vadd.f32 %v218, %v302
  %v305 = vadd.f32 %v219, %v303
  %v306 = vsel %vm32, %v256, inf
  %v307 = vsel %vm33, %v253, inf
  %v308 = vsel %vm34, %v261, inf
  %v309 = vsel %vm35, %v265, inf
  %310 = vrot.lane.b32.xlu0 %v246, 1
  %v311 = vpop.permute.xlu0 %310
  %312 = vrot.lane.b32.xlu0 %v247, 1
  %v313 = vpop.permute.xlu0 %312
  %v316 = vsel %vm36, %v311, inf
  %v317 = vsel %vm36, %v313, inf
  %318 = vrot.lane.b32.xlu0 %v246, 127
  %v319 = vpop.permute.xlu0 %318
  %320 = vrot.lane.b32.xlu0 %v247, 127
  %v321 = vpop.permute.xlu0 %320
  %v324 = vsel %vm37, %v319, inf
  %v325 = vsel %vm37, %v321, inf
  %v326 = vmin.f32 %v306, %v308
  %v327 = vmin.f32 %v307, %v309
  %v328 = vmin.f32 %v316, %v324
  %v329 = vmin.f32 %v317, %v325
  %v330 = vmin.f32 %v326, %v328
  %v331 = vmin.f32 %v327, %v329
  %v332 = vmin.f32 %v330, %v246
  %v333 = vmin.f32 %v331, %v247
  %v335 = vrot.slane %v333, 7
  %v338 = vrot.slane %v332, 7
  %v339 = vsel %vm42, %v338, %v335
  %v342 = vsel %vm42, %v335, %v338
  %v343 = vsel %vm32, %v342, -inf
  %v344 = vsel %vm33, %v339, -inf
  %v345 = vrot.slane %v332, 1
  %v346 = vrot.slane %v333, 1
  %v347 = vsel %vm50, %v345, %v346
  %v351 = vsel %vm50, %v346, %v345
  %v352 = vsel %vm34, %v347, -inf
  %v353 = vsel %vm35, %v351, -inf
  %v354 = vmax.f32 %v343, %v352
  %v355 = vmax.f32 %v344, %v353
  %v356 = vmax.f32 %v354, %v332
  %v357 = vmax.f32 %v355, %v333
  %360 = vrot.lane.b32.xlu0 %v356, 1
  %v361 = vpop.permute.xlu0 %360
  %362 = vrot.lane.b32.xlu0 %v357, 1
  %v363 = vpop.permute.xlu0 %362
  %v366 = vsel %vm36, %v361, -inf
  %v367 = vsel %vm36, %v363, -inf
  %368 = vrot.lane.b32.xlu0 %v356, 127
  %v369 = vpop.permute.xlu0 %368
  %370 = vrot.lane.b32.xlu0 %v357, 127
  %v371 = vpop.permute.xlu0 %370
  %v374 = vsel %vm37, %v369, -inf
  %v375 = vsel %vm37, %v371, -inf
  %v376 = vmax.f32 %v366, %v374
  %v377 = vmax.f32 %v367, %v375
  %v378 = vmax.f32 %v376, %v356
  %v379 = vmax.f32 %v377, %v357
  %v380 = vsub.f32 %v246, %v378
  %v381 = vsub.f32 %v247, %v379
  %v382 = vmax.f32 %v380, 0.0
  %v383 = vmax.f32 %v381, 0.0
  %v384 = vmul.f32 %v304, %v382
  %v385 = vmul.f32 %v305, %v383
  %v386 = vsub.f32 %v382, %v384
  %v387 = vsub.f32 %v383, %v385
  %v388 = vmax.f32 %v386, 0.0
  %v389 = vmax.f32 %v387, 0.0
  %v390 = vadd.f32 %v304, %v388
  %v391 = vadd.f32 %v305, %v389
  %v393 = vrot.slane %v12, 7
  %v396 = vrot.slane %v11, 7
  %v397 = vsel %vm42, %v396, %v393
  %v400 = vsel %vm42, %v393, %v396
  %v401 = vsel %vm32, %v400, inf
  %v402 = vsel %vm33, %v397, inf
  %v403 = vrot.slane %v11, 1
  %v404 = vrot.slane %v12, 1
  %v405 = vsel %vm50, %v403, %v404
  %v409 = vsel %vm50, %v404, %v403
  %v410 = vsel %vm34, %v405, inf
  %v411 = vsel %vm35, %v409, inf
  %412 = vrot.lane.b32.xlu0 %v11, 1
  %v413 = vpop.permute.xlu0 %412
  %414 = vrot.lane.b32.xlu0 %v12, 1
  %v415 = vpop.permute.xlu0 %414
  %v418 = vsel %vm36, %v413, inf
  %v419 = vsel %vm36, %v415, inf
  %420 = vrot.lane.b32.xlu0 %v11, 127
  %v421 = vpop.permute.xlu0 %420
  %422 = vrot.lane.b32.xlu0 %v12, 127
  %v423 = vpop.permute.xlu0 %422
  %v426 = vsel %vm37, %v421, inf
  %v427 = vsel %vm37, %v423, inf
  %v428 = vmin.f32 %v401, %v410
  %v429 = vmin.f32 %v402, %v411
  %v430 = vmin.f32 %v418, %v426
  %v431 = vmin.f32 %v419, %v427
  %v432 = vmin.f32 %v428, %v430
  %v433 = vmin.f32 %v429, %v431
  %v434 = vmin.f32 %v432, %v11
  %v435 = vmin.f32 %v433, %v12
  %v437 = vrot.slane %v435, 7
  %v440 = vrot.slane %v434, 7
  %v441 = vsel %vm42, %v440, %v437
  %v444 = vsel %vm42, %v437, %v440
  %v445 = vsel %vm32, %v444, -inf
  %v446 = vsel %vm33, %v441, -inf
  %v447 = vrot.slane %v434, 1
  %v448 = vrot.slane %v435, 1
  %v449 = vsel %vm50, %v447, %v448
  %v453 = vsel %vm50, %v448, %v447
  %v454 = vsel %vm34, %v449, -inf
  %v455 = vsel %vm35, %v453, -inf
  %v456 = vmax.f32 %v445, %v454
  %v457 = vmax.f32 %v446, %v455
  %v458 = vmax.f32 %v456, %v434
  %v459 = vmax.f32 %v457, %v435
  %462 = vrot.lane.b32.xlu0 %v458, 1
  %v463 = vpop.permute.xlu0 %462
  %464 = vrot.lane.b32.xlu0 %v459, 1
  %v465 = vpop.permute.xlu0 %464
  %v468 = vsel %vm36, %v463, -inf
  %v469 = vsel %vm36, %v465, -inf
  %470 = vrot.lane.b32.xlu0 %v458, 127
  %v471 = vpop.permute.xlu0 %470
  %472 = vrot.lane.b32.xlu0 %v459, 127
  %v473 = vpop.permute.xlu0 %472
  %v476 = vsel %vm37, %v471, -inf
  %v477 = vsel %vm37, %v473, -inf
  %v478 = vmax.f32 %v468, %v476
  %v479 = vmax.f32 %v469, %v477
  %v480 = vmax.f32 %v478, %v458
  %v481 = vmax.f32 %v479, %v459
  %v482 = vsub.f32 %v11, %v480
  %v483 = vsub.f32 %v12, %v481
  %v484 = vmax.f32 %v482, 0.0
  %v485 = vmax.f32 %v483, 0.0
  %v486 = vsel %vm32, %v444, inf
  %v487 = vsel %vm33, %v441, inf
  %v488 = vsel %vm34, %v449, inf
  %v489 = vsel %vm35, %v453, inf
  %490 = vrot.lane.b32.xlu0 %v434, 1
  %v491 = vpop.permute.xlu0 %490
  %492 = vrot.lane.b32.xlu0 %v435, 1
  %v493 = vpop.permute.xlu0 %492
  %v496 = vsel %vm36, %v491, inf
  %v497 = vsel %vm36, %v493, inf
  %498 = vrot.lane.b32.xlu0 %v434, 127
  %v499 = vpop.permute.xlu0 %498
  %500 = vrot.lane.b32.xlu0 %v435, 127
  %v501 = vpop.permute.xlu0 %500
  %v504 = vsel %vm37, %v499, inf
  %v505 = vsel %vm37, %v501, inf
  %v506 = vmin.f32 %v486, %v488
  %v507 = vmin.f32 %v487, %v489
  %v508 = vmin.f32 %v496, %v504
  %v509 = vmin.f32 %v497, %v505
  %v510 = vmin.f32 %v506, %v508
  %v511 = vmin.f32 %v507, %v509
  %v512 = vmin.f32 %v510, %v434
  %v513 = vmin.f32 %v511, %v435
  %v515 = vrot.slane %v513, 7
  %v518 = vrot.slane %v512, 7
  %v519 = vsel %vm42, %v518, %v515
  %v522 = vsel %vm42, %v515, %v518
  %v523 = vsel %vm32, %v522, -inf
  %v524 = vsel %vm33, %v519, -inf
  %v525 = vrot.slane %v512, 1
  %v526 = vrot.slane %v513, 1
  %v527 = vsel %vm50, %v525, %v526
  %v531 = vsel %vm50, %v526, %v525
  %v532 = vsel %vm34, %v527, -inf
  %v533 = vsel %vm35, %v531, -inf
  %v534 = vmax.f32 %v523, %v532
  %v535 = vmax.f32 %v524, %v533
  %v536 = vmax.f32 %v534, %v512
  %v537 = vmax.f32 %v535, %v513
  %540 = vrot.lane.b32.xlu0 %v536, 1
  %v541 = vpop.permute.xlu0 %540
  %542 = vrot.lane.b32.xlu0 %v537, 1
  %v543 = vpop.permute.xlu0 %542
  %v546 = vsel %vm36, %v541, -inf
  %v547 = vsel %vm36, %v543, -inf
  %548 = vrot.lane.b32.xlu0 %v536, 127
  %v549 = vpop.permute.xlu0 %548
  %550 = vrot.lane.b32.xlu0 %v537, 127
  %v551 = vpop.permute.xlu0 %550
  %v554 = vsel %vm37, %v549, -inf
  %v555 = vsel %vm37, %v551, -inf
  %v556 = vmax.f32 %v546, %v554
  %v557 = vmax.f32 %v547, %v555
  %v558 = vmax.f32 %v556, %v536
  %v559 = vmax.f32 %v557, %v537
  %v560 = vsub.f32 %v434, %v558
  %v561 = vsub.f32 %v435, %v559
  %v562 = vmax.f32 %v560, 0.0
  %v563 = vmax.f32 %v561, 0.0
  %v564 = vmul.f32 %v484, %v562
  %v565 = vmul.f32 %v485, %v563
  %v566 = vsub.f32 %v562, %v564
  %v567 = vsub.f32 %v563, %v565
  %v568 = vmax.f32 %v566, 0.0
  %v569 = vmax.f32 %v567, 0.0
  %v570 = vadd.f32 %v484, %v568
  %v571 = vadd.f32 %v485, %v569
  %v572 = vsel %vm32, %v522, inf
  %v573 = vsel %vm33, %v519, inf
  %v574 = vsel %vm34, %v527, inf
  %v575 = vsel %vm35, %v531, inf
  %576 = vrot.lane.b32.xlu0 %v512, 1
  %v577 = vpop.permute.xlu0 %576
  %578 = vrot.lane.b32.xlu0 %v513, 1
  %v579 = vpop.permute.xlu0 %578
  %v582 = vsel %vm36, %v577, inf
  %v583 = vsel %vm36, %v579, inf
  %584 = vrot.lane.b32.xlu0 %v512, 127
  %v585 = vpop.permute.xlu0 %584
  %586 = vrot.lane.b32.xlu0 %v513, 127
  %v587 = vpop.permute.xlu0 %586
  %v590 = vsel %vm37, %v585, inf
  %v591 = vsel %vm37, %v587, inf
  %v592 = vmin.f32 %v572, %v574
  %v593 = vmin.f32 %v573, %v575
  %v594 = vmin.f32 %v582, %v590
  %v595 = vmin.f32 %v583, %v591
  %v596 = vmin.f32 %v592, %v594
  %v597 = vmin.f32 %v593, %v595
  %v598 = vmin.f32 %v596, %v512
  %v599 = vmin.f32 %v597, %v513
  %v601 = vrot.slane %v599, 7
  %v604 = vrot.slane %v598, 7
  %v605 = vsel %vm42, %v604, %v601
  %v608 = vsel %vm42, %v601, %v604
  %v609 = vsel %vm32, %v608, -inf
  %v610 = vsel %vm33, %v605, -inf
  %v611 = vrot.slane %v598, 1
  %v612 = vrot.slane %v599, 1
  %v613 = vsel %vm50, %v611, %v612
  %v617 = vsel %vm50, %v612, %v611
  %v618 = vsel %vm34, %v613, -inf
  %v619 = vsel %vm35, %v617, -inf
  %v620 = vmax.f32 %v609, %v618
  %v621 = vmax.f32 %v610, %v619
  %v622 = vmax.f32 %v620, %v598
  %v623 = vmax.f32 %v621, %v599
  %626 = vrot.lane.b32.xlu0 %v622, 1
  %v627 = vpop.permute.xlu0 %626
  %628 = vrot.lane.b32.xlu0 %v623, 1
  %v629 = vpop.permute.xlu0 %628
  %v632 = vsel %vm36, %v627, -inf
  %v633 = vsel %vm36, %v629, -inf
  %634 = vrot.lane.b32.xlu0 %v622, 127
  %v635 = vpop.permute.xlu0 %634
  %636 = vrot.lane.b32.xlu0 %v623, 127
  %v637 = vpop.permute.xlu0 %636
  %v640 = vsel %vm37, %v635, -inf
  %v641 = vsel %vm37, %v637, -inf
  %v642 = vmax.f32 %v632, %v640
  %v643 = vmax.f32 %v633, %v641
  %v644 = vmax.f32 %v642, %v622
  %v645 = vmax.f32 %v643, %v623
  %v646 = vsub.f32 %v512, %v644
  %v647 = vsub.f32 %v513, %v645
  %v648 = vmax.f32 %v646, 0.0
  %v649 = vmax.f32 %v647, 0.0
  %v650 = vmul.f32 %v570, %v648
  %v651 = vmul.f32 %v571, %v649
  %v652 = vsub.f32 %v648, %v650
  %v653 = vsub.f32 %v649, %v651
  %v654 = vmax.f32 %v652, 0.0
  %v655 = vmax.f32 %v653, 0.0
  %v656 = vadd.f32 %v570, %v654
  %v657 = vadd.f32 %v571, %v655
  %v658 = vsel %vm32, %v608, inf
  %v659 = vsel %vm33, %v605, inf
  %v660 = vsel %vm34, %v613, inf
  %v661 = vsel %vm35, %v617, inf
  %662 = vrot.lane.b32.xlu0 %v598, 1
  %v663 = vpop.permute.xlu0 %662
  %664 = vrot.lane.b32.xlu0 %v599, 1
  %v665 = vpop.permute.xlu0 %664
  %v668 = vsel %vm36, %v663, inf
  %v669 = vsel %vm36, %v665, inf
  %670 = vrot.lane.b32.xlu0 %v598, 127
  %v671 = vpop.permute.xlu0 %670
  %672 = vrot.lane.b32.xlu0 %v599, 127
  %v673 = vpop.permute.xlu0 %672
  %v676 = vsel %vm37, %v671, inf
  %v677 = vsel %vm37, %v673, inf
  %v678 = vmin.f32 %v658, %v660
  %v679 = vmin.f32 %v659, %v661
  %v680 = vmin.f32 %v668, %v676
  %v681 = vmin.f32 %v669, %v677
  %v682 = vmin.f32 %v678, %v680
  %v683 = vmin.f32 %v679, %v681
  %v684 = vmin.f32 %v682, %v598
  %v685 = vmin.f32 %v683, %v599
  %v687 = vrot.slane %v685, 7
  %v690 = vrot.slane %v684, 7
  %v691 = vsel %vm42, %v690, %v687
  %v694 = vsel %vm42, %v687, %v690
  %v695 = vsel %vm32, %v694, -inf
  %v696 = vsel %vm33, %v691, -inf
  %v697 = vrot.slane %v684, 1
  %v698 = vrot.slane %v685, 1
  %v699 = vsel %vm50, %v697, %v698
  %v703 = vsel %vm50, %v698, %v697
  %v704 = vsel %vm34, %v699, -inf
  %v705 = vsel %vm35, %v703, -inf
  %v706 = vmax.f32 %v695, %v704
  %v707 = vmax.f32 %v696, %v705
  %v708 = vmax.f32 %v706, %v684
  %v709 = vmax.f32 %v707, %v685
  %712 = vrot.lane.b32.xlu0 %v708, 1
  %v713 = vpop.permute.xlu0 %712
  %714 = vrot.lane.b32.xlu0 %v709, 1
  %v715 = vpop.permute.xlu0 %714
  %v718 = vsel %vm36, %v713, -inf
  %v719 = vsel %vm36, %v715, -inf
  %720 = vrot.lane.b32.xlu0 %v708, 127
  %v721 = vpop.permute.xlu0 %720
  %722 = vrot.lane.b32.xlu0 %v709, 127
  %v723 = vpop.permute.xlu0 %722
  %v726 = vsel %vm37, %v721, -inf
  %v727 = vsel %vm37, %v723, -inf
  %v728 = vmax.f32 %v718, %v726
  %v729 = vmax.f32 %v719, %v727
  %v730 = vmax.f32 %v728, %v708
  %v731 = vmax.f32 %v729, %v709
  %v732 = vsub.f32 %v598, %v730
  %v733 = vsub.f32 %v599, %v731
  %v734 = vmax.f32 %v732, 0.0
  %v735 = vmax.f32 %v733, 0.0
  %v736 = vmul.f32 %v656, %v734
  %v737 = vmul.f32 %v657, %v735
  %v738 = vsub.f32 %v734, %v736
  %v739 = vsub.f32 %v735, %v737
  %v740 = vmax.f32 %v738, 0.0
  %v741 = vmax.f32 %v739, 0.0
  %v742 = vadd.f32 %v656, %v740
  %v743 = vadd.f32 %v657, %v741
  %v744 = vmul.f32 %v11, %v13
  %v745 = vmul.f32 %v12, %v14
  %v746 = vadd.f32 %v744, 0.0
  %v747 = vadd.f32 %v745, 0.0
  %v748 = vadd.f32 %v746, %v747
  %v749 = vrot.slane %v748, 4
  %v750 = vadd.f32 %v748, %v749
  %v751 = vrot.slane %v750, 2
  %v752 = vadd.f32 %v750, %v751
  %v753 = vrot.slane %v752, 1
  %v754 = vadd.f32 %v752, %v753
  %v755 = vadd.f32 %v11, 0.0
  %v756 = vadd.f32 %v12, 0.0
  %v757 = vadd.f32 %v755, %v756
  %v758 = vrot.slane %v757, 4
  %v759 = vadd.f32 %v757, %v758
  %v760 = vrot.slane %v759, 2
  %v761 = vadd.f32 %v759, %v760
  %v762 = vrot.slane %v761, 1
  %v763 = vadd.f32 %v761, %v762
  %v764 = vadd.f32 %v13, 0.0
  %v765 = vadd.f32 %v14, 0.0
  %v766 = vadd.f32 %v764, %v765
  %v767 = vrot.slane %v766, 4
  %v768 = vadd.f32 %v766, %v767
  %v769 = vrot.slane %v768, 2
  %v770 = vadd.f32 %v768, %v769
  %v771 = vrot.slane %v770, 1
  %v772 = vadd.f32 %v770, %v771
  %v773 = vmul.f32 %v390, %v11
  %v774 = vmul.f32 %v391, %v12
  %v775 = vadd.f32 %v773, 0.0
  %v776 = vadd.f32 %v774, 0.0
  %v777 = vadd.f32 %v775, %v776
  %v778 = vrot.slane %v777, 4
  %v779 = vadd.f32 %v777, %v778
  %v780 = vrot.slane %v779, 2
  %v781 = vadd.f32 %v779, %v780
  %v782 = vrot.slane %v781, 1
  %v783 = vadd.f32 %v781, %v782
  %v784 = vadd.f32 %v390, 0.0
  %v785 = vadd.f32 %v391, 0.0
  %v786 = vadd.f32 %v784, %v785
  %v787 = vrot.slane %v786, 4
  %v788 = vadd.f32 %v786, %v787
  %v789 = vrot.slane %v788, 2
  %v790 = vadd.f32 %v788, %v789
  %v791 = vrot.slane %v790, 1
  %v792 = vadd.f32 %v790, %v791
  %v793 = vmul.f32 %v742, %v13
  %v794 = vmul.f32 %v743, %v14
  %v795 = vadd.f32 %v793, 0.0
  %v796 = vadd.f32 %v794, 0.0
  %v797 = vadd.f32 %v795, %v796
  %v798 = vrot.slane %v797, 4
  %v799 = vadd.f32 %v797, %v798
  %v800 = vrot.slane %v799, 2
  %v801 = vadd.f32 %v799, %v800
  %v802 = vrot.slane %v801, 1
  %v803 = vadd.f32 %v801, %v802
  %v804 = vadd.f32 %v742, 0.0
  %v805 = vadd.f32 %v743, 0.0
  %v806 = vadd.f32 %v804, %v805
  %v807 = vrot.slane %v806, 4
  %v808 = vadd.f32 %v806, %v807
  %v809 = vrot.slane %v808, 2
  %v810 = vadd.f32 %v808, %v809
  %v811 = vrot.slane %v810, 1
  %v812 = vadd.f32 %v810, %v811
  %v813 = vsel %vm42, %v754, %v763
  %vm814 = vcmask 1041408
  %v815 = vsel %vm814, %v813, %v772
  %vm816 = vcmask 1042432
  %v817 = vsel %vm816, %v815, %v783
  %vm818 = vcmask 1043456
  %v819 = vsel %vm818, %v817, %v792
  %vm820 = vcmask 1044480
  %v821 = vsel %vm820, %v819, %v803
  %vm822 = vcmask 1045504
  %v823 = vsel %vm822, %v821, %v812
  %v824 = vsel %vm50, %v823, 0.0
  %825 = vst [vmem:[%s2] sm:$0xff] %v824
  // Predicated region
  $region10: #{soft_dice_cldice.1} parent=0 // pred_check
    _
  $region11: #{soft_dice_cldice.1} parent=0 // pred_check_branch
    %827 = sbr.rel (0) target = $region13
  $region12: #{soft_dice_cldice.1} parent=0 // pred_region
    _
  $region13: #{soft_dice_cldice.1} parent=0 // pred_fallthru
    _
  // Predicated region
  $region14: #{soft_dice_cldice.1} parent=0 // pred_check
    _
  $region15: #{soft_dice_cldice.1} parent=0 // pred_check_branch
    %829 = sbr.rel (0) target = $region17
  $region16: #{soft_dice_cldice.1} parent=0 // pred_region
    _
  $region17: #{soft_dice_cldice.1} parent=0 // pred_fallthru
    _

</llo_original>
